<compile_context>
chip_gen: v7x
topology: tpu7x:2x2x1
jax: 0.10.0
libtpu: 0.0.40
codegen_flags: <defaults>
</compile_context>

<pallas_src>
import functools

import jax
import jax.numpy as jnp
from jax import lax
from jax.experimental import pallas as pl
from jax.experimental.pallas import tpu as pltpu

KSIZE = 7
PAD = 3  # padding = 3 for kernel_size == 7


# ---------------------------------------------------------------------------
# Hardware-aware sizing helpers.
# ---------------------------------------------------------------------------
def _budgets():
    """(per-x-tile byte budget, vmem_limit cap) per TPU generation."""
    try:
        vmem = int(pltpu.get_tpu_info().vmem_capacity_bytes)
    except Exception:  # no query available -> assume 128 MiB class
        vmem = 128 * 1024 * 1024
    if vmem <= 64 * 1024 * 1024:          # v7x-class: 64 MiB per TensorCore
        tile_budget = 4 * 1024 * 1024
    else:                                  # v5e / v6e: 128 MiB
        tile_budget = 12 * 1024 * 1024
    vmem_cap = (vmem * 3) // 4
    return tile_budget, vmem_cap


def _vmem_limit(need_bytes, cap):
    return int(min(cap, max(need_bytes, 32 * 1024 * 1024)))


def _sublane_pack(itemsize):
    """Rows per packed vreg sublane group: 8 (f32), 16 (bf16), 32 (int8)."""
    return max(8, 32 // int(itemsize))


def _unroll_hint(rc, hw):
    """Fixed partial unroll, bounded so ~<=16 live vregs of chunk data."""
    chunk_bytes = rc * hw * 4
    return max(1, min(4, (64 * 1024) // max(1, chunk_bytes)))


def _c_tiling(c, hw, itemsize, budget, rc):
    """Budget-driven, dtype-aware C tiling: returns (tc, c_pad, n_tiles).

    tc is a multiple of the sublane pack rc, tc * n_tiles == c_pad >= c, and
    tc * hw * itemsize stays near `budget`.  Never produces a fully padded
    tile, so only the max needs masking for the padded channels.
    """
    def rup(a, m):
        return ((a + m - 1) // m) * m

    rows_budget = max(rc, (budget // max(1, hw * itemsize)) // rc * rc)
    n_tiles = -(-c // rows_budget)
    tc = rup(-(-c // n_tiles), rc)
    c_pad = n_tiles * tc
    return tc, c_pad, n_tiles


# ---------------------------------------------------------------------------
# In-kernel building blocks.
# ---------------------------------------------------------------------------
def _shift_flat(a, off):
    """out[:, p] = a[:, p + off] when in range, else 0.   a: (1, n) f32."""
    n = a.shape[-1]
    if off == 0:
        return a
    if abs(off) >= n:
        return jnp.zeros_like(a)
    zeros = jnp.zeros((a.shape[0], abs(off)), a.dtype)
    if off > 0:
        return jnp.concatenate([a[:, off:], zeros], axis=1)
    return jnp.concatenate([zeros, a[:, : n + off]], axis=1)


def _conv_sigmoid(w_ref, avg, mx, ksize, pad, h, wdim):
    """KxK 'same' conv (2 in-ch -> 1 out-ch, no bias) on flat maps + sigmoid.

    avg, mx: (1, h*wdim) f32.  w_ref: SMEM (2*K*K,) f32 laid out [ci, ky, kx]
    row-major (PyTorch OIHW with O == 1).  Returns (1, h*wdim) f32.
    """
    hw = h * wdim
    k2 = ksize * ksize
    col = lax.broadcasted_iota(jnp.int32, (1, hw), 1) % wdim

    # 7 column-masked lane-shifted copies of each map, reused for every row
    # offset: 2*K lane shifts + K row shifts instead of 2*K*K shifted slices.
    sa, sm = [], []
    for dx in range(ksize):
        ox = dx - pad
        cmask = jnp.logical_and(col + ox >= 0, col + ox < wdim)
        sa.append(jnp.where(cmask, _shift_flat(avg, ox), 0.0))
        sm.append(jnp.where(cmask, _shift_flat(mx, ox), 0.0))

    acc = jnp.zeros((1, hw), jnp.float32)
    for dy in range(ksize):
        part = jnp.zeros((1, hw), jnp.float32)
        for dx in range(ksize):
            part = part + w_ref[dy * ksize + dx] * sa[dx]            # avg channel
            part = part + w_ref[k2 + dy * ksize + dx] * sm[dx]       # max channel
        # Row shift: flat shift by oy*W zero-fills exactly the out-of-range rows.
        acc = acc + _shift_flat(part, (dy - pad) * wdim)

    # sigmoid: exp goes to the EUP; exact divide only touches the tiny map.
    return 1.0 / (1.0 + jnp.exp(-acc))


def _tile_sum_max(x_ref, rc, mask_fn):
    """Channel sum / max over x_ref (1, T, HW) in rc-row register-carried
    chunks.  mask_fn(start, rows) -> bool (1, rows, 1) mask of *real*
    channels (or None).  Returns ((1,1,HW) f32 sum, (1,1,HW) f32 max)."""
    rows_total, hw = x_ref.shape[1], x_ref.shape[2]
    trips, rem = divmod(rows_total, rc)

    def chunk(s_acc, m_acc, start, rows):
        sub = x_ref[:, pl.ds(start, rows), :].astype(jnp.float32)
        msk = mask_fn(start, rows)
        sub_m = sub if msk is None else jnp.where(msk, sub, -jnp.inf)
        s_acc = s_acc + jnp.sum(sub, axis=1, keepdims=True)
        m_acc = jnp.maximum(m_acc, jnp.max(sub_m, axis=1, keepdims=True))
        return s_acc, m_acc

    s = jnp.zeros((1, 1, hw), jnp.float32)
    m = jnp.full((1, 1, hw), -jnp.inf, jnp.float32)
    if trips > 0:
        def body(i, carry):
            start = pl.multiple_of(i * rc, rc)
            return chunk(carry[0], carry[1], start, rc)

        s, m = lax.fori_loop(0, trips, body, (s, m),
                             unroll=min(trips, _unroll_hint(rc, hw)))
    if rem:
        s, m = chunk(s, m, trips * rc, rem)
    return s, m


def _apply_attn(x_ref, o_ref, attn, rc):
    """o = x * attn.  x_ref/o_ref: (1, T, HW); attn: (1, 1, HW) f32."""
    rows_total, hw = x_ref.shape[1], x_ref.shape[2]
    trips, rem = divmod(rows_total, rc)
    if trips > 0:
        # Hoisted sublane broadcast: emitted once, reused every iteration.
        attn_b = jnp.broadcast_to(attn, (1, rc, hw))

        def body(i, carry):
            start = pl.multiple_of(i * rc, rc)
            sub = x_ref[:, pl.ds(start, rc), :].astype(jnp.float32)
            o_ref[:, pl.ds(start, rc), :] = (sub * attn_b).astype(o_ref.dtype)
            return carry

        lax.fori_loop(0, trips, body, 0, unroll=min(trips, _unroll_hint(rc, hw)))
    if rem:
        start = trips * rc
        sub = x_ref[:, pl.ds(start, rem), :].astype(jnp.float32)
        o_ref[:, pl.ds(start, rem), :] = (sub * attn).astype(o_ref.dtype)


# ---------------------------------------------------------------------------
# Fused fast path: one kernel per image (reduce -> conv -> sigmoid -> apply).
# ---------------------------------------------------------------------------
def _fused_kernel(w_ref, x_ref, o_ref, *, inv_c, ksize, pad, h, wdim, rc):
    # w_ref: SMEM (2*K*K,) f32;   x_ref, o_ref: VMEM (1, C, HW)
    s, m = _tile_sum_max(x_ref, rc, lambda start, rows: None)
    attn = _conv_sigmoid(w_ref, s[0] * inv_c, m[0], ksize, pad, h, wdim)  # (1, HW)
    _apply_attn(x_ref, o_ref, attn[None], rc)


# ---------------------------------------------------------------------------
# General path, Pass A: channel reduce over C tiles + fused conv/sigmoid
# finalize (writes attn directly -> no avg/max HBM round trip).
# ---------------------------------------------------------------------------
def _reduce_conv_kernel(w_ref, x_ref, attn_ref, sum_sc, max_sc, *,
                        inv_c, c_true, tc, ksize, pad, h, wdim, rc, masked):
    # x_ref: VMEM (1, tc, HW) one C tile of one batch row
    # attn_ref: VMEM (1, 1, HW) f32 output (written on the last C step)
    # sum_sc, max_sc: VMEM (1, 1, HW) f32 accumulators (persist across C)
    c_step = pl.program_id(1)
    nc = pl.num_programs(1)

    @pl.when(c_step == 0)
    def _init():
        sum_sc[...] = jnp.zeros_like(sum_sc)
        max_sc[...] = jnp.full_like(max_sc, -jnp.inf)

    if masked:
        base = c_step * tc

        def mask_fn(start, rows):
            ch = base + start + lax.broadcasted_iota(jnp.int32, (1, rows, 1), 1)
            return ch < c_true
    else:
        def mask_fn(start, rows):
            return None

    # Register-carried partial over this tile; single scratch RMW per step.
    s, m = _tile_sum_max(x_ref, rc, mask_fn)
    sum_sc[...] = sum_sc[...] + s
    max_sc[...] = jnp.maximum(max_sc[...], m)

    @pl.when(c_step == nc - 1)
    def _finalize():
        attn_ref[0] = _conv_sigmoid(w_ref, sum_sc[0] * inv_c, max_sc[0],
                                    ksize, pad, h, wdim)


# ---------------------------------------------------------------------------
# General path, Pass B: lane-dense broadcast multiply, fully parallel grid.
# ---------------------------------------------------------------------------
def _apply_kernel(x_ref, attn_ref, o_ref, *, rc):
    _apply_attn(x_ref, o_ref, attn_ref[...], rc)


# ---------------------------------------------------------------------------
# Wrapper
# ---------------------------------------------------------------------------
@functools.partial(jax.jit, static_argnames=("c_tile_budget_bytes",))
def spatial_attention(x, conv_w, *, c_tile_budget_bytes=None):
    """x: (B, C, H, W); conv_w: (1, 2, K, K) conv weight (no bias)."""
    B, C, H, Wd = x.shape
    HW = H * Wd
    itemsize = jnp.dtype(x.dtype).itemsize
    rc = _sublane_pack(itemsize)

    x_flat = x.reshape(B, C, HW)                        # lane-dense layout
    w_flat = conv_w.astype(jnp.float32).reshape(-1)     # (2*K*K,) scalar weights

    tile_budget, vmem_cap = _budgets()
    if c_tile_budget_bytes is not None:
        tile_budget = int(c_tile_budget_bytes)

    img_bytes = C * HW * itemsize

    # ---- Fast path: whole image per grid step, fully fused. ----------------
    if img_bytes <= tile_budget:
        limit = _vmem_limit(4 * img_bytes + 4 * HW * 4 + (1 << 20), vmem_cap)
        out_flat = pl.pallas_call(
            functools.partial(_fused_kernel, inv_c=1.0 / C, ksize=KSIZE,
                              pad=PAD, h=H, wdim=Wd, rc=rc),
            out_shape=jax.ShapeDtypeStruct((B, C, HW), x.dtype),
            grid=(B,),
            in_specs=[pl.BlockSpec(memory_space=pltpu.MemorySpace.SMEM),
                      pl.BlockSpec((1, C, HW), lambda b: (b, 0, 0))],
            out_specs=pl.BlockSpec((1, C, HW), lambda b: (b, 0, 0)),
            compiler_params=pltpu.CompilerParams(
                dimension_semantics=("parallel",), vmem_limit_bytes=limit),
        )(w_flat, x_flat)
        return out_flat.reshape(B, C, H, Wd)

    # ---- General two-pass path. ---------------------------------------------
    tc, c_pad, nc = _c_tiling(C, HW, itemsize, tile_budget, rc)
    masked = c_pad != C
    x_p = x_flat if not masked else jnp.pad(x_flat, ((0, 0), (0, c_pad - C), (0, 0)))
    tile_bytes = tc * HW * itemsize

    # Pass A: channel mean / max + 7x7 conv + sigmoid -> attn (B, 1, HW) f32.
    limit_a = _vmem_limit(2 * tile_bytes + 8 * HW * 4 + (2 << 20), vmem_cap)
    attn = pl.pallas_call(
        functools.partial(_reduce_conv_kernel, inv_c=1.0 / C, c_true=C, tc=tc,
                          ksize=KSIZE, pad=PAD, h=H, wdim=Wd, rc=rc,
                          masked=masked),
        out_shape=jax.ShapeDtypeStruct((B, 1, HW), jnp.float32),
        grid=(B, nc),
        in_specs=[pl.BlockSpec(memory_space=pltpu.MemorySpace.SMEM),
                  pl.BlockSpec((1, tc, HW), lambda b, c: (b, c, 0))],
        out_specs=pl.BlockSpec((1, 1, HW), lambda b, c: (b, 0, 0)),
        scratch_shapes=[pltpu.VMEM((1, 1, HW), jnp.float32),
                        pltpu.VMEM((1, 1, HW), jnp.float32)],
        compiler_params=pltpu.CompilerParams(
            dimension_semantics=("parallel", "arbitrary"),
            vmem_limit_bytes=limit_a),
    )(w_flat, x_p)

    # Pass B: out = x * attn, lane-dense, both grid axes parallel.
    limit_b = _vmem_limit(4 * tile_bytes + 4 * HW * 4 + (2 << 20), vmem_cap)
    out_p = pl.pallas_call(
        functools.partial(_apply_kernel, rc=rc),
        out_shape=jax.ShapeDtypeStruct((B, c_pad, HW), x.dtype),
        grid=(B, nc),
        in_specs=[pl.BlockSpec((1, tc, HW), lambda b, c: (b, c, 0)),
                  pl.BlockSpec((1, 1, HW), lambda b, c: (b, 0, 0))],
        out_specs=pl.BlockSpec((1, tc, HW), lambda b, c: (b, c, 0)),
        compiler_params=pltpu.CompilerParams(
            dimension_semantics=("parallel", "parallel"),
            vmem_limit_bytes=limit_b),
    )(x_p, attn)

    out = out_p[:, :C] if masked else out_p
    return out.reshape(B, C, H, Wd)


# ---------------------------------------------------------------------------
# Pure-JAX reference (matches the PyTorch module).
# ---------------------------------------------------------------------------
def reference(x, conv_w):
    avg = jnp.mean(x, axis=1, keepdims=True)
    mx = jnp.max(x, axis=1, keepdims=True)
    comb = jnp.concatenate([avg, mx], axis=1)
    conv = lax.conv_general_dilated(
        comb, conv_w, window_strides=(1, 1),
        padding=((PAD, PAD), (PAD, PAD)),
        dimension_numbers=("NCHW", "OIHW", "NCHW"),
        precision=lax.Precision.HIGHEST)
    return x * jax.nn.sigmoid(conv)


if __name__ == "__main__":
    key = jax.random.PRNGKey(0)
    kx, kw, kx2 = jax.random.split(key, 3)

    # Primary shape implied by the module: B=2, C=4, H=W=16 (fused fast path).
    B, C, H, W = 2, 4, 16, 16
    x = jax.random.normal(kx, (B, C, H, W), dtype=jnp.float32)
    conv_w = 0.1 * jax.random.normal(kw, (1, 2, KSIZE, KSIZE), dtype=jnp.float32)

    out = jax.block_until_ready(spatial_attention(x, conv_w))
    ref = jax.block_until_ready(reference(x, conv_w))
    assert out.shape == (B, C, H, W)
    assert jnp.allclose(out, ref, atol=2e-5, rtol=2e-5), "fused path mismatch"

    # Secondary check: force the general two-pass path (C tiled over several
    # grid steps, zero-padded + masked channels) by shrinking the tile budget.
    x2 = jax.random.normal(kx2, (2, 20, 16, 16), dtype=jnp.float32)
    out2 = jax.block_until_ready(
        spatial_attention(x2, conv_w, c_tile_budget_bytes=8 * 16 * 16 * 4))
    ref2 = jax.block_until_ready(reference(x2, conv_w))
    assert out2.shape == x2.shape
    assert jnp.allclose(out2, ref2, atol=2e-5, rtol=2e-5), "two-pass mismatch"

    print("KERNEL_OK")
</pallas_src>

<mosaic_0001>
module attributes {stable_mosaic.version = 11 : i64} {
  func.func @_fused_kernel(%arg0: i32, %arg1: memref<98xf32, #tpu.memory_space<smem>>, %arg2: memref<1x4x256xf32, #tpu.memory_space<vmem>>, %arg3: memref<1x4x256xf32, #tpu.memory_space<vmem>>) attributes {dimension_semantics = [#tpu.dimension_semantics<parallel>], iteration_bounds = array<i64: 2>, scalar_prefetch = 0 : i64, scratch_operands = 0 : i64, tpu.core_type = #tpu.core_type<tc>, window_params = [{transform_indices = @transform_0, window_bounds = array<i64: 98>}, {transform_indices = @transform_1, window_bounds = array<i64: 1, 4, 256>}, {transform_indices = @transform_2, window_bounds = array<i64: 1, 4, 256>}]} {
    %cst = arith.constant 0.000000e+00 : f32
    %0 = vector.broadcast %cst : f32 to vector<1x1x256xf32>
    %cst_0 = arith.constant 0xFF800000 : f32
    %1 = vector.broadcast %cst_0 : f32 to vector<1x1x256xf32>
    %c0 = arith.constant 0 : index
    %c0_1 = arith.constant 0 : index
    %c0_2 = arith.constant 0 : index
    %2 = vector.load %arg2[%c0, %c0_1, %c0_2] : memref<1x4x256xf32, #tpu.memory_space<vmem>>, vector<1x4x256xf32>
    %cst_3 = arith.constant dense<0.000000e+00> : vector<1x256xf32>
    %3 = vector.multi_reduction <add>, %2, %cst_3 [1] : vector<1x4x256xf32> to vector<1x256xf32>
    %4 = vector.shape_cast %3 : vector<1x256xf32> to vector<1x1x256xf32>
    %5 = arith.addf %0, %4 : vector<1x1x256xf32>
    %cst_4 = arith.constant dense<0xFF800000> : vector<1x256xf32>
    %6 = vector.multi_reduction <maximumf>, %2, %cst_4 [1] : vector<1x4x256xf32> to vector<1x256xf32>
    %7 = vector.shape_cast %6 : vector<1x256xf32> to vector<1x1x256xf32>
    %8 = arith.maximumf %1, %7 : vector<1x1x256xf32>
    %9 = vector.shape_cast %5 : vector<1x1x256xf32> to vector<1x256xf32>
    %cst_5 = arith.constant 2.500000e-01 : f32
    %10 = vector.broadcast %cst_5 : f32 to vector<1x256xf32>
    %11 = arith.mulf %9, %10 : vector<1x256xf32>
    %12 = vector.shape_cast %8 : vector<1x1x256xf32> to vector<1x256xf32>
    %13 = tpu.iota {dimensions = array<i32: 1>} : vector<1x256xi32>
    %c16_i32 = arith.constant 16 : i32
    %c0_i32 = arith.constant 0 : i32
    %14 = arith.cmpi eq, %c16_i32, %c0_i32 : i32
    %c1_i32 = arith.constant 1 : i32
    %15 = arith.select %14, %c1_i32, %c16_i32 : i32
    %16 = vector.broadcast %15 : i32 to vector<1x256xi32>
    %17 = arith.remsi %13, %16 : vector<1x256xi32>
    %c0_i32_6 = arith.constant 0 : i32
    %18 = vector.broadcast %c0_i32_6 : i32 to vector<1x256xi32>
    %19 = arith.cmpi ne, %17, %18 : vector<1x256xi32>
    %c0_i32_7 = arith.constant 0 : i32
    %20 = vector.broadcast %c0_i32_7 : i32 to vector<1x256xi32>
    %21 = arith.cmpi slt, %17, %20 : vector<1x256xi32>
    %c0_i32_8 = arith.constant 0 : i32
    %22 = arith.cmpi slt, %15, %c0_i32_8 : i32
    %23 = vector.broadcast %22 : i1 to vector<1x256xi1>
    %24 = vector.broadcast %23 : vector<1x256xi1> to vector<1x256xi1>
    %25 = arith.xori %21, %24 : vector<1x256xi1>
    %26 = arith.andi %25, %19 : vector<1x256xi1>
    %27 = vector.broadcast %15 : i32 to vector<1x256xi32>
    %28 = arith.addi %17, %27 : vector<1x256xi32>
    %29 = arith.select %26, %28, %17 : vector<1x256xi1>, vector<1x256xi32>
    %c-3_i32 = arith.constant -3 : i32
    %30 = vector.broadcast %c-3_i32 : i32 to vector<1x256xi32>
    %31 = arith.addi %29, %30 : vector<1x256xi32>
    %c0_i32_9 = arith.constant 0 : i32
    %32 = vector.broadcast %c0_i32_9 : i32 to vector<1x256xi32>
    %33 = arith.cmpi sge, %31, %32 : vector<1x256xi32>
    %c-3_i32_10 = arith.constant -3 : i32
    %34 = vector.broadcast %c-3_i32_10 : i32 to vector<1x256xi32>
    %35 = arith.addi %29, %34 : vector<1x256xi32>
    %c16_i32_11 = arith.constant 16 : i32
    %36 = vector.broadcast %c16_i32_11 : i32 to vector<1x256xi32>
    %37 = arith.cmpi slt, %35, %36 : vector<1x256xi32>
    %38 = arith.andi %33, %37 : vector<1x256xi1>
    %cst_12 = arith.constant 0.000000e+00 : f32
    %39 = vector.broadcast %cst_12 : f32 to vector<1x3xf32>
    %40 = vector.extract_strided_slice %11 {offsets = [0, 0], sizes = [1, 253], strides = [1, 1]} : vector<1x256xf32> to vector<1x253xf32>
    %41 = tpu.concatenate %39, %40 in 1 : vector<1x3xf32>, vector<1x253xf32> -> vector<1x256xf32>
    %cst_13 = arith.constant 0.000000e+00 : f32
    %42 = vector.broadcast %cst_13 : f32 to vector<1x256xf32>
    %43 = arith.select %38, %41, %42 : vector<1x256xi1>, vector<1x256xf32>
    %cst_14 = arith.constant 0.000000e+00 : f32
    %44 = vector.broadcast %cst_14 : f32 to vector<1x3xf32>
    %45 = vector.extract_strided_slice %12 {offsets = [0, 0], sizes = [1, 253], strides = [1, 1]} : vector<1x256xf32> to vector<1x253xf32>
    %46 = tpu.concatenate %44, %45 in 1 : vector<1x3xf32>, vector<1x253xf32> -> vector<1x256xf32>
    %cst_15 = arith.constant 0.000000e+00 : f32
    %47 = vector.broadcast %cst_15 : f32 to vector<1x256xf32>
    %48 = arith.select %38, %46, %47 : vector<1x256xi1>, vector<1x256xf32>
    %c-2_i32 = arith.constant -2 : i32
    %49 = vector.broadcast %c-2_i32 : i32 to vector<1x256xi32>
    %50 = arith.addi %29, %49 : vector<1x256xi32>
    %c0_i32_16 = arith.constant 0 : i32
    %51 = vector.broadcast %c0_i32_16 : i32 to vector<1x256xi32>
    %52 = arith.cmpi sge, %50, %51 : vector<1x256xi32>
    %c-2_i32_17 = arith.constant -2 : i32
    %53 = vector.broadcast %c-2_i32_17 : i32 to vector<1x256xi32>
    %54 = arith.addi %29, %53 : vector<1x256xi32>
    %c16_i32_18 = arith.constant 16 : i32
    %55 = vector.broadcast %c16_i32_18 : i32 to vector<1x256xi32>
    %56 = arith.cmpi slt, %54, %55 : vector<1x256xi32>
    %57 = arith.andi %52, %56 : vector<1x256xi1>
    %cst_19 = arith.constant 0.000000e+00 : f32
    %58 = vector.broadcast %cst_19 : f32 to vector<1x2xf32>
    %59 = vector.extract_strided_slice %11 {offsets = [0, 0], sizes = [1, 254], strides = [1, 1]} : vector<1x256xf32> to vector<1x254xf32>
    %60 = tpu.concatenate %58, %59 in 1 : vector<1x2xf32>, vector<1x254xf32> -> vector<1x256xf32>
    %cst_20 = arith.constant 0.000000e+00 : f32
    %61 = vector.broadcast %cst_20 : f32 to vector<1x256xf32>
    %62 = arith.select %57, %60, %61 : vector<1x256xi1>, vector<1x256xf32>
    %cst_21 = arith.constant 0.000000e+00 : f32
    %63 = vector.broadcast %cst_21 : f32 to vector<1x2xf32>
    %64 = vector.extract_strided_slice %12 {offsets = [0, 0], sizes = [1, 254], strides = [1, 1]} : vector<1x256xf32> to vector<1x254xf32>
    %65 = tpu.concatenate %63, %64 in 1 : vector<1x2xf32>, vector<1x254xf32> -> vector<1x256xf32>
    %cst_22 = arith.constant 0.000000e+00 : f32
    %66 = vector.broadcast %cst_22 : f32 to vector<1x256xf32>
    %67 = arith.select %57, %65, %66 : vector<1x256xi1>, vector<1x256xf32>
    %c-1_i32 = arith.constant -1 : i32
    %68 = vector.broadcast %c-1_i32 : i32 to vector<1x256xi32>
    %69 = arith.addi %29, %68 : vector<1x256xi32>
    %c0_i32_23 = arith.constant 0 : i32
    %70 = vector.broadcast %c0_i32_23 : i32 to vector<1x256xi32>
    %71 = arith.cmpi sge, %69, %70 : vector<1x256xi32>
    %c-1_i32_24 = arith.constant -1 : i32
    %72 = vector.broadcast %c-1_i32_24 : i32 to vector<1x256xi32>
    %73 = arith.addi %29, %72 : vector<1x256xi32>
    %c16_i32_25 = arith.constant 16 : i32
    %74 = vector.broadcast %c16_i32_25 : i32 to vector<1x256xi32>
    %75 = arith.cmpi slt, %73, %74 : vector<1x256xi32>
    %76 = arith.andi %71, %75 : vector<1x256xi1>
    %cst_26 = arith.constant 0.000000e+00 : f32
    %77 = vector.broadcast %cst_26 : f32 to vector<1x1xf32>
    %78 = vector.extract_strided_slice %11 {offsets = [0, 0], sizes = [1, 255], strides = [1, 1]} : vector<1x256xf32> to vector<1x255xf32>
    %79 = tpu.concatenate %77, %78 in 1 : vector<1x1xf32>, vector<1x255xf32> -> vector<1x256xf32>
    %cst_27 = arith.constant 0.000000e+00 : f32
    %80 = vector.broadcast %cst_27 : f32 to vector<1x256xf32>
    %81 = arith.select %76, %79, %80 : vector<1x256xi1>, vector<1x256xf32>
    %cst_28 = arith.constant 0.000000e+00 : f32
    %82 = vector.broadcast %cst_28 : f32 to vector<1x1xf32>
    %83 = vector.extract_strided_slice %12 {offsets = [0, 0], sizes = [1, 255], strides = [1, 1]} : vector<1x256xf32> to vector<1x255xf32>
    %84 = tpu.concatenate %82, %83 in 1 : vector<1x1xf32>, vector<1x255xf32> -> vector<1x256xf32>
    %cst_29 = arith.constant 0.000000e+00 : f32
    %85 = vector.broadcast %cst_29 : f32 to vector<1x256xf32>
    %86 = arith.select %76, %84, %85 : vector<1x256xi1>, vector<1x256xf32>
    %c0_i32_30 = arith.constant 0 : i32
    %87 = vector.broadcast %c0_i32_30 : i32 to vector<1x256xi32>
    %88 = arith.addi %29, %87 : vector<1x256xi32>
    %c0_i32_31 = arith.constant 0 : i32
    %89 = vector.broadcast %c0_i32_31 : i32 to vector<1x256xi32>
    %90 = arith.cmpi sge, %88, %89 : vector<1x256xi32>
    %c0_i32_32 = arith.constant 0 : i32
    %91 = vector.broadcast %c0_i32_32 : i32 to vector<1x256xi32>
    %92 = arith.addi %29, %91 : vector<1x256xi32>
    %c16_i32_33 = arith.constant 16 : i32
    %93 = vector.broadcast %c16_i32_33 : i32 to vector<1x256xi32>
    %94 = arith.cmpi slt, %92, %93 : vector<1x256xi32>
    %95 = arith.andi %90, %94 : vector<1x256xi1>
    %cst_34 = arith.constant 0.000000e+00 : f32
    %96 = vector.broadcast %cst_34 : f32 to vector<1x256xf32>
    %97 = arith.select %95, %11, %96 : vector<1x256xi1>, vector<1x256xf32>
    %cst_35 = arith.constant 0.000000e+00 : f32
    %98 = vector.broadcast %cst_35 : f32 to vector<1x256xf32>
    %99 = arith.select %95, %12, %98 : vector<1x256xi1>, vector<1x256xf32>
    %c1_i32_36 = arith.constant 1 : i32
    %100 = vector.broadcast %c1_i32_36 : i32 to vector<1x256xi32>
    %101 = arith.addi %29, %100 : vector<1x256xi32>
    %c0_i32_37 = arith.constant 0 : i32
    %102 = vector.broadcast %c0_i32_37 : i32 to vector<1x256xi32>
    %103 = arith.cmpi sge, %101, %102 : vector<1x256xi32>
    %c1_i32_38 = arith.constant 1 : i32
    %104 = vector.broadcast %c1_i32_38 : i32 to vector<1x256xi32>
    %105 = arith.addi %29, %104 : vector<1x256xi32>
    %c16_i32_39 = arith.constant 16 : i32
    %106 = vector.broadcast %c16_i32_39 : i32 to vector<1x256xi32>
    %107 = arith.cmpi slt, %105, %106 : vector<1x256xi32>
    %108 = arith.andi %103, %107 : vector<1x256xi1>
    %cst_40 = arith.constant 0.000000e+00 : f32
    %109 = vector.broadcast %cst_40 : f32 to vector<1x1xf32>
    %110 = vector.extract_strided_slice %11 {offsets = [0, 1], sizes = [1, 255], strides = [1, 1]} : vector<1x256xf32> to vector<1x255xf32>
    %111 = tpu.concatenate %110, %109 in 1 : vector<1x255xf32>, vector<1x1xf32> -> vector<1x256xf32>
    %cst_41 = arith.constant 0.000000e+00 : f32
    %112 = vector.broadcast %cst_41 : f32 to vector<1x256xf32>
    %113 = arith.select %108, %111, %112 : vector<1x256xi1>, vector<1x256xf32>
    %cst_42 = arith.constant 0.000000e+00 : f32
    %114 = vector.broadcast %cst_42 : f32 to vector<1x1xf32>
    %115 = vector.extract_strided_slice %12 {offsets = [0, 1], sizes = [1, 255], strides = [1, 1]} : vector<1x256xf32> to vector<1x255xf32>
    %116 = tpu.concatenate %115, %114 in 1 : vector<1x255xf32>, vector<1x1xf32> -> vector<1x256xf32>
    %cst_43 = arith.constant 0.000000e+00 : f32
    %117 = vector.broadcast %cst_43 : f32 to vector<1x256xf32>
    %118 = arith.select %108, %116, %117 : vector<1x256xi1>, vector<1x256xf32>
    %c2_i32 = arith.constant 2 : i32
    %119 = vector.broadcast %c2_i32 : i32 to vector<1x256xi32>
    %120 = arith.addi %29, %119 : vector<1x256xi32>
    %c0_i32_44 = arith.constant 0 : i32
    %121 = vector.broadcast %c0_i32_44 : i32 to vector<1x256xi32>
    %122 = arith.cmpi sge, %120, %121 : vector<1x256xi32>
    %c2_i32_45 = arith.constant 2 : i32
    %123 = vector.broadcast %c2_i32_45 : i32 to vector<1x256xi32>
    %124 = arith.addi %29, %123 : vector<1x256xi32>
    %c16_i32_46 = arith.constant 16 : i32
    %125 = vector.broadcast %c16_i32_46 : i32 to vector<1x256xi32>
    %126 = arith.cmpi slt, %124, %125 : vector<1x256xi32>
    %127 = arith.andi %122, %126 : vector<1x256xi1>
    %cst_47 = arith.constant 0.000000e+00 : f32
    %128 = vector.broadcast %cst_47 : f32 to vector<1x2xf32>
    %129 = vector.extract_strided_slice %11 {offsets = [0, 2], sizes = [1, 254], strides = [1, 1]} : vector<1x256xf32> to vector<1x254xf32>
    %130 = tpu.concatenate %129, %128 in 1 : vector<1x254xf32>, vector<1x2xf32> -> vector<1x256xf32>
    %cst_48 = arith.constant 0.000000e+00 : f32
    %131 = vector.broadcast %cst_48 : f32 to vector<1x256xf32>
    %132 = arith.select %127, %130, %131 : vector<1x256xi1>, vector<1x256xf32>
    %cst_49 = arith.constant 0.000000e+00 : f32
    %133 = vector.broadcast %cst_49 : f32 to vector<1x2xf32>
    %134 = vector.extract_strided_slice %12 {offsets = [0, 2], sizes = [1, 254], strides = [1, 1]} : vector<1x256xf32> to vector<1x254xf32>
    %135 = tpu.concatenate %134, %133 in 1 : vector<1x254xf32>, vector<1x2xf32> -> vector<1x256xf32>
    %cst_50 = arith.constant 0.000000e+00 : f32
    %136 = vector.broadcast %cst_50 : f32 to vector<1x256xf32>
    %137 = arith.select %127, %135, %136 : vector<1x256xi1>, vector<1x256xf32>
    %c3_i32 = arith.constant 3 : i32
    %138 = vector.broadcast %c3_i32 : i32 to vector<1x256xi32>
    %139 = arith.addi %29, %138 : vector<1x256xi32>
    %c0_i32_51 = arith.constant 0 : i32
    %140 = vector.broadcast %c0_i32_51 : i32 to vector<1x256xi32>
    %141 = arith.cmpi sge, %139, %140 : vector<1x256xi32>
    %c3_i32_52 = arith.constant 3 : i32
    %142 = vector.broadcast %c3_i32_52 : i32 to vector<1x256xi32>
    %143 = arith.addi %29, %142 : vector<1x256xi32>
    %c16_i32_53 = arith.constant 16 : i32
    %144 = vector.broadcast %c16_i32_53 : i32 to vector<1x256xi32>
    %145 = arith.cmpi slt, %143, %144 : vector<1x256xi32>
    %146 = arith.andi %141, %145 : vector<1x256xi1>
    %cst_54 = arith.constant 0.000000e+00 : f32
    %147 = vector.broadcast %cst_54 : f32 to vector<1x3xf32>
    %148 = vector.extract_strided_slice %11 {offsets = [0, 3], sizes = [1, 253], strides = [1, 1]} : vector<1x256xf32> to vector<1x253xf32>
    %149 = tpu.concatenate %148, %147 in 1 : vector<1x253xf32>, vector<1x3xf32> -> vector<1x256xf32>
    %cst_55 = arith.constant 0.000000e+00 : f32
    %150 = vector.broadcast %cst_55 : f32 to vector<1x256xf32>
    %151 = arith.select %146, %149, %150 : vector<1x256xi1>, vector<1x256xf32>
    %cst_56 = arith.constant 0.000000e+00 : f32
    %152 = vector.broadcast %cst_56 : f32 to vector<1x3xf32>
    %153 = vector.extract_strided_slice %12 {offsets = [0, 3], sizes = [1, 253], strides = [1, 1]} : vector<1x256xf32> to vector<1x253xf32>
    %154 = tpu.concatenate %153, %152 in 1 : vector<1x253xf32>, vector<1x3xf32> -> vector<1x256xf32>
    %cst_57 = arith.constant 0.000000e+00 : f32
    %155 = vector.broadcast %cst_57 : f32 to vector<1x256xf32>
    %156 = arith.select %146, %154, %155 : vector<1x256xi1>, vector<1x256xf32>
    %cst_58 = arith.constant 0.000000e+00 : f32
    %157 = vector.broadcast %cst_58 : f32 to vector<1x256xf32>
    %cst_59 = arith.constant 0.000000e+00 : f32
    %158 = vector.broadcast %cst_59 : f32 to vector<1x256xf32>
    %c0_60 = arith.constant 0 : index
    %159 = memref.load %arg1[%c0_60] : memref<98xf32, #tpu.memory_space<smem>>
    %160 = vector.broadcast %159 : f32 to vector<1x256xf32>
    %161 = arith.mulf %160, %43 : vector<1x256xf32>
    %162 = arith.addf %158, %161 : vector<1x256xf32>
    %c49 = arith.constant 49 : index
    %163 = memref.load %arg1[%c49] : memref<98xf32, #tpu.memory_space<smem>>
    %164 = vector.broadcast %163 : f32 to vector<1x256xf32>
    %165 = arith.mulf %164, %48 : vector<1x256xf32>
    %166 = arith.addf %162, %165 : vector<1x256xf32>
    %c1 = arith.constant 1 : index
    %167 = memref.load %arg1[%c1] : memref<98xf32, #tpu.memory_space<smem>>
    %168 = vector.broadcast %167 : f32 to vector<1x256xf32>
    %169 = arith.mulf %168, %62 : vector<1x256xf32>
    %170 = arith.addf %166, %169 : vector<1x256xf32>
    %c50 = arith.constant 50 : index
    %171 = memref.load %arg1[%c50] : memref<98xf32, #tpu.memory_space<smem>>
    %172 = vector.broadcast %171 : f32 to vector<1x256xf32>
    %173 = arith.mulf %172, %67 : vector<1x256xf32>
    %174 = arith.addf %170, %173 : vector<1x256xf32>
    %c2 = arith.constant 2 : index
    %175 = memref.load %arg1[%c2] : memref<98xf32, #tpu.memory_space<smem>>
    %176 = vector.broadcast %175 : f32 to vector<1x256xf32>
    %177 = arith.mulf %176, %81 : vector<1x256xf32>
    %178 = arith.addf %174, %177 : vector<1x256xf32>
    %c51 = arith.constant 51 : index
    %179 = memref.load %arg1[%c51] : memref<98xf32, #tpu.memory_space<smem>>
    %180 = vector.broadcast %179 : f32 to vector<1x256xf32>
    %181 = arith.mulf %180, %86 : vector<1x256xf32>
    %182 = arith.addf %178, %181 : vector<1x256xf32>
    %c3 = arith.constant 3 : index
    %183 = memref.load %arg1[%c3] : memref<98xf32, #tpu.memory_space<smem>>
    %184 = vector.broadcast %183 : f32 to vector<1x256xf32>
    %185 = arith.mulf %184, %97 : vector<1x256xf32>
    %186 = arith.addf %182, %185 : vector<1x256xf32>
    %c52 = arith.constant 52 : index
    %187 = memref.load %arg1[%c52] : memref<98xf32, #tpu.memory_space<smem>>
    %188 = vector.broadcast %187 : f32 to vector<1x256xf32>
    %189 = arith.mulf %188, %99 : vector<1x256xf32>
    %190 = arith.addf %186, %189 : vector<1x256xf32>
    %c4 = arith.constant 4 : index
    %191 = memref.load %arg1[%c4] : memref<98xf32, #tpu.memory_space<smem>>
    %192 = vector.broadcast %191 : f32 to vector<1x256xf32>
    %193 = arith.mulf %192, %113 : vector<1x256xf32>
    %194 = arith.addf %190, %193 : vector<1x256xf32>
    %c53 = arith.constant 53 : index
    %195 = memref.load %arg1[%c53] : memref<98xf32, #tpu.memory_space<smem>>
    %196 = vector.broadcast %195 : f32 to vector<1x256xf32>
    %197 = arith.mulf %196, %118 : vector<1x256xf32>
    %198 = arith.addf %194, %197 : vector<1x256xf32>
    %c5 = arith.constant 5 : index
    %199 = memref.load %arg1[%c5] : memref<98xf32, #tpu.memory_space<smem>>
    %200 = vector.broadcast %199 : f32 to vector<1x256xf32>
    %201 = arith.mulf %200, %132 : vector<1x256xf32>
    %202 = arith.addf %198, %201 : vector<1x256xf32>
    %c54 = arith.constant 54 : index
    %203 = memref.load %arg1[%c54] : memref<98xf32, #tpu.memory_space<smem>>
    %204 = vector.broadcast %203 : f32 to vector<1x256xf32>
    %205 = arith.mulf %204, %137 : vector<1x256xf32>
    %206 = arith.addf %202, %205 : vector<1x256xf32>
    %c6 = arith.constant 6 : index
    %207 = memref.load %arg1[%c6] : memref<98xf32, #tpu.memory_space<smem>>
    %208 = vector.broadcast %207 : f32 to vector<1x256xf32>
    %209 = arith.mulf %208, %151 : vector<1x256xf32>
    %210 = arith.addf %206, %209 : vector<1x256xf32>
    %c55 = arith.constant 55 : index
    %211 = memref.load %arg1[%c55] : memref<98xf32, #tpu.memory_space<smem>>
    %212 = vector.broadcast %211 : f32 to vector<1x256xf32>
    %213 = arith.mulf %212, %156 : vector<1x256xf32>
    %214 = arith.addf %210, %213 : vector<1x256xf32>
    %cst_61 = arith.constant 0.000000e+00 : f32
    %215 = vector.broadcast %cst_61 : f32 to vector<1x48xf32>
    %216 = vector.extract_strided_slice %214 {offsets = [0, 0], sizes = [1, 208], strides = [1, 1]} : vector<1x256xf32> to vector<1x208xf32>
    %217 = tpu.concatenate %215, %216 in 1 : vector<1x48xf32>, vector<1x208xf32> -> vector<1x256xf32>
    %218 = arith.addf %157, %217 : vector<1x256xf32>
    %cst_62 = arith.constant 0.000000e+00 : f32
    %219 = vector.broadcast %cst_62 : f32 to vector<1x256xf32>
    %c7 = arith.constant 7 : index
    %220 = memref.load %arg1[%c7] : memref<98xf32, #tpu.memory_space<smem>>
    %221 = vector.broadcast %220 : f32 to vector<1x256xf32>
    %222 = arith.mulf %221, %43 : vector<1x256xf32>
    %223 = arith.addf %219, %222 : vector<1x256xf32>
    %c56 = arith.constant 56 : index
    %224 = memref.load %arg1[%c56] : memref<98xf32, #tpu.memory_space<smem>>
    %225 = vector.broadcast %224 : f32 to vector<1x256xf32>
    %226 = arith.mulf %225, %48 : vector<1x256xf32>
    %227 = arith.addf %223, %226 : vector<1x256xf32>
    %c8 = arith.constant 8 : index
    %228 = memref.load %arg1[%c8] : memref<98xf32, #tpu.memory_space<smem>>
    %229 = vector.broadcast %228 : f32 to vector<1x256xf32>
    %230 = arith.mulf %229, %62 : vector<1x256xf32>
    %231 = arith.addf %227, %230 : vector<1x256xf32>
    %c57 = arith.constant 57 : index
    %232 = memref.load %arg1[%c57] : memref<98xf32, #tpu.memory_space<smem>>
    %233 = vector.broadcast %232 : f32 to vector<1x256xf32>
    %234 = arith.mulf %233, %67 : vector<1x256xf32>
    %235 = arith.addf %231, %234 : vector<1x256xf32>
    %c9 = arith.constant 9 : index
    %236 = memref.load %arg1[%c9] : memref<98xf32, #tpu.memory_space<smem>>
    %237 = vector.broadcast %236 : f32 to vector<1x256xf32>
    %238 = arith.mulf %237, %81 : vector<1x256xf32>
    %239 = arith.addf %235, %238 : vector<1x256xf32>
    %c58 = arith.constant 58 : index
    %240 = memref.load %arg1[%c58] : memref<98xf32, #tpu.memory_space<smem>>
    %241 = vector.broadcast %240 : f32 to vector<1x256xf32>
    %242 = arith.mulf %241, %86 : vector<1x256xf32>
    %243 = arith.addf %239, %242 : vector<1x256xf32>
    %c10 = arith.constant 10 : index
    %244 = memref.load %arg1[%c10] : memref<98xf32, #tpu.memory_space<smem>>
    %245 = vector.broadcast %244 : f32 to vector<1x256xf32>
    %246 = arith.mulf %245, %97 : vector<1x256xf32>
    %247 = arith.addf %243, %246 : vector<1x256xf32>
    %c59 = arith.constant 59 : index
    %248 = memref.load %arg1[%c59] : memref<98xf32, #tpu.memory_space<smem>>
    %249 = vector.broadcast %248 : f32 to vector<1x256xf32>
    %250 = arith.mulf %249, %99 : vector<1x256xf32>
    %251 = arith.addf %247, %250 : vector<1x256xf32>
    %c11 = arith.constant 11 : index
    %252 = memref.load %arg1[%c11] : memref<98xf32, #tpu.memory_space<smem>>
    %253 = vector.broadcast %252 : f32 to vector<1x256xf32>
    %254 = arith.mulf %253, %113 : vector<1x256xf32>
    %255 = arith.addf %251, %254 : vector<1x256xf32>
    %c60 = arith.constant 60 : index
    %256 = memref.load %arg1[%c60] : memref<98xf32, #tpu.memory_space<smem>>
    %257 = vector.broadcast %256 : f32 to vector<1x256xf32>
    %258 = arith.mulf %257, %118 : vector<1x256xf32>
    %259 = arith.addf %255, %258 : vector<1x256xf32>
    %c12 = arith.constant 12 : index
    %260 = memref.load %arg1[%c12] : memref<98xf32, #tpu.memory_space<smem>>
    %261 = vector.broadcast %260 : f32 to vector<1x256xf32>
    %262 = arith.mulf %261, %132 : vector<1x256xf32>
    %263 = arith.addf %259, %262 : vector<1x256xf32>
    %c61 = arith.constant 61 : index
    %264 = memref.load %arg1[%c61] : memref<98xf32, #tpu.memory_space<smem>>
    %265 = vector.broadcast %264 : f32 to vector<1x256xf32>
    %266 = arith.mulf %265, %137 : vector<1x256xf32>
    %267 = arith.addf %263, %266 : vector<1x256xf32>
    %c13 = arith.constant 13 : index
    %268 = memref.load %arg1[%c13] : memref<98xf32, #tpu.memory_space<smem>>
    %269 = vector.broadcast %268 : f32 to vector<1x256xf32>
    %270 = arith.mulf %269, %151 : vector<1x256xf32>
    %271 = arith.addf %267, %270 : vector<1x256xf32>
    %c62 = arith.constant 62 : index
    %272 = memref.load %arg1[%c62] : memref<98xf32, #tpu.memory_space<smem>>
    %273 = vector.broadcast %272 : f32 to vector<1x256xf32>
    %274 = arith.mulf %273, %156 : vector<1x256xf32>
    %275 = arith.addf %271, %274 : vector<1x256xf32>
    %cst_63 = arith.constant 0.000000e+00 : f32
    %276 = vector.broadcast %cst_63 : f32 to vector<1x32xf32>
    %277 = vector.extract_strided_slice %275 {offsets = [0, 0], sizes = [1, 224], strides = [1, 1]} : vector<1x256xf32> to vector<1x224xf32>
    %278 = tpu.concatenate %276, %277 in 1 : vector<1x32xf32>, vector<1x224xf32> -> vector<1x256xf32>
    %279 = arith.addf %218, %278 : vector<1x256xf32>
    %cst_64 = arith.constant 0.000000e+00 : f32
    %280 = vector.broadcast %cst_64 : f32 to vector<1x256xf32>
    %c14 = arith.constant 14 : index
    %281 = memref.load %arg1[%c14] : memref<98xf32, #tpu.memory_space<smem>>
    %282 = vector.broadcast %281 : f32 to vector<1x256xf32>
    %283 = arith.mulf %282, %43 : vector<1x256xf32>
    %284 = arith.addf %280, %283 : vector<1x256xf32>
    %c63 = arith.constant 63 : index
    %285 = memref.load %arg1[%c63] : memref<98xf32, #tpu.memory_space<smem>>
    %286 = vector.broadcast %285 : f32 to vector<1x256xf32>
    %287 = arith.mulf %286, %48 : vector<1x256xf32>
    %288 = arith.addf %284, %287 : vector<1x256xf32>
    %c15 = arith.constant 15 : index
    %289 = memref.load %arg1[%c15] : memref<98xf32, #tpu.memory_space<smem>>
    %290 = vector.broadcast %289 : f32 to vector<1x256xf32>
    %291 = arith.mulf %290, %62 : vector<1x256xf32>
    %292 = arith.addf %288, %291 : vector<1x256xf32>
    %c64 = arith.constant 64 : index
    %293 = memref.load %arg1[%c64] : memref<98xf32, #tpu.memory_space<smem>>
    %294 = vector.broadcast %293 : f32 to vector<1x256xf32>
    %295 = arith.mulf %294, %67 : vector<1x256xf32>
    %296 = arith.addf %292, %295 : vector<1x256xf32>
    %c16 = arith.constant 16 : index
    %297 = memref.load %arg1[%c16] : memref<98xf32, #tpu.memory_space<smem>>
    %298 = vector.broadcast %297 : f32 to vector<1x256xf32>
    %299 = arith.mulf %298, %81 : vector<1x256xf32>
    %300 = arith.addf %296, %299 : vector<1x256xf32>
    %c65 = arith.constant 65 : index
    %301 = memref.load %arg1[%c65] : memref<98xf32, #tpu.memory_space<smem>>
    %302 = vector.broadcast %301 : f32 to vector<1x256xf32>
    %303 = arith.mulf %302, %86 : vector<1x256xf32>
    %304 = arith.addf %300, %303 : vector<1x256xf32>
    %c17 = arith.constant 17 : index
    %305 = memref.load %arg1[%c17] : memref<98xf32, #tpu.memory_space<smem>>
    %306 = vector.broadcast %305 : f32 to vector<1x256xf32>
    %307 = arith.mulf %306, %97 : vector<1x256xf32>
    %308 = arith.addf %304, %307 : vector<1x256xf32>
    %c66 = arith.constant 66 : index
    %309 = memref.load %arg1[%c66] : memref<98xf32, #tpu.memory_space<smem>>
    %310 = vector.broadcast %309 : f32 to vector<1x256xf32>
    %311 = arith.mulf %310, %99 : vector<1x256xf32>
    %312 = arith.addf %308, %311 : vector<1x256xf32>
    %c18 = arith.constant 18 : index
    %313 = memref.load %arg1[%c18] : memref<98xf32, #tpu.memory_space<smem>>
    %314 = vector.broadcast %313 : f32 to vector<1x256xf32>
    %315 = arith.mulf %314, %113 : vector<1x256xf32>
    %316 = arith.addf %312, %315 : vector<1x256xf32>
    %c67 = arith.constant 67 : index
    %317 = memref.load %arg1[%c67] : memref<98xf32, #tpu.memory_space<smem>>
    %318 = vector.broadcast %317 : f32 to vector<1x256xf32>
    %319 = arith.mulf %318, %118 : vector<1x256xf32>
    %320 = arith.addf %316, %319 : vector<1x256xf32>
    %c19 = arith.constant 19 : index
    %321 = memref.load %arg1[%c19] : memref<98xf32, #tpu.memory_space<smem>>
    %322 = vector.broadcast %321 : f32 to vector<1x256xf32>
    %323 = arith.mulf %322, %132 : vector<1x256xf32>
    %324 = arith.addf %320, %323 : vector<1x256xf32>
    %c68 = arith.constant 68 : index
    %325 = memref.load %arg1[%c68] : memref<98xf32, #tpu.memory_space<smem>>
    %326 = vector.broadcast %325 : f32 to vector<1x256xf32>
    %327 = arith.mulf %326, %137 : vector<1x256xf32>
    %328 = arith.addf %324, %327 : vector<1x256xf32>
    %c20 = arith.constant 20 : index
    %329 = memref.load %arg1[%c20] : memref<98xf32, #tpu.memory_space<smem>>
    %330 = vector.broadcast %329 : f32 to vector<1x256xf32>
    %331 = arith.mulf %330, %151 : vector<1x256xf32>
    %332 = arith.addf %328, %331 : vector<1x256xf32>
    %c69 = arith.constant 69 : index
    %333 = memref.load %arg1[%c69] : memref<98xf32, #tpu.memory_space<smem>>
    %334 = vector.broadcast %333 : f32 to vector<1x256xf32>
    %335 = arith.mulf %334, %156 : vector<1x256xf32>
    %336 = arith.addf %332, %335 : vector<1x256xf32>
    %cst_65 = arith.constant 0.000000e+00 : f32
    %337 = vector.broadcast %cst_65 : f32 to vector<1x16xf32>
    %338 = vector.extract_strided_slice %336 {offsets = [0, 0], sizes = [1, 240], strides = [1, 1]} : vector<1x256xf32> to vector<1x240xf32>
    %339 = tpu.concatenate %337, %338 in 1 : vector<1x16xf32>, vector<1x240xf32> -> vector<1x256xf32>
    %340 = arith.addf %279, %339 : vector<1x256xf32>
    %cst_66 = arith.constant 0.000000e+00 : f32
    %341 = vector.broadcast %cst_66 : f32 to vector<1x256xf32>
    %c21 = arith.constant 21 : index
    %342 = memref.load %arg1[%c21] : memref<98xf32, #tpu.memory_space<smem>>
    %343 = vector.broadcast %342 : f32 to vector<1x256xf32>
    %344 = arith.mulf %343, %43 : vector<1x256xf32>
    %345 = arith.addf %341, %344 : vector<1x256xf32>
    %c70 = arith.constant 70 : index
    %346 = memref.load %arg1[%c70] : memref<98xf32, #tpu.memory_space<smem>>
    %347 = vector.broadcast %346 : f32 to vector<1x256xf32>
    %348 = arith.mulf %347, %48 : vector<1x256xf32>
    %349 = arith.addf %345, %348 : vector<1x256xf32>
    %c22 = arith.constant 22 : index
    %350 = memref.load %arg1[%c22] : memref<98xf32, #tpu.memory_space<smem>>
    %351 = vector.broadcast %350 : f32 to vector<1x256xf32>
    %352 = arith.mulf %351, %62 : vector<1x256xf32>
    %353 = arith.addf %349, %352 : vector<1x256xf32>
    %c71 = arith.constant 71 : index
    %354 = memref.load %arg1[%c71] : memref<98xf32, #tpu.memory_space<smem>>
    %355 = vector.broadcast %354 : f32 to vector<1x256xf32>
    %356 = arith.mulf %355, %67 : vector<1x256xf32>
    %357 = arith.addf %353, %356 : vector<1x256xf32>
    %c23 = arith.constant 23 : index
    %358 = memref.load %arg1[%c23] : memref<98xf32, #tpu.memory_space<smem>>
    %359 = vector.broadcast %358 : f32 to vector<1x256xf32>
    %360 = arith.mulf %359, %81 : vector<1x256xf32>
    %361 = arith.addf %357, %360 : vector<1x256xf32>
    %c72 = arith.constant 72 : index
    %362 = memref.load %arg1[%c72] : memref<98xf32, #tpu.memory_space<smem>>
    %363 = vector.broadcast %362 : f32 to vector<1x256xf32>
    %364 = arith.mulf %363, %86 : vector<1x256xf32>
    %365 = arith.addf %361, %364 : vector<1x256xf32>
    %c24 = arith.constant 24 : index
    %366 = memref.load %arg1[%c24] : memref<98xf32, #tpu.memory_space<smem>>
    %367 = vector.broadcast %366 : f32 to vector<1x256xf32>
    %368 = arith.mulf %367, %97 : vector<1x256xf32>
    %369 = arith.addf %365, %368 : vector<1x256xf32>
    %c73 = arith.constant 73 : index
    %370 = memref.load %arg1[%c73] : memref<98xf32, #tpu.memory_space<smem>>
    %371 = vector.broadcast %370 : f32 to vector<1x256xf32>
    %372 = arith.mulf %371, %99 : vector<1x256xf32>
    %373 = arith.addf %369, %372 : vector<1x256xf32>
    %c25 = arith.constant 25 : index
    %374 = memref.load %arg1[%c25] : memref<98xf32, #tpu.memory_space<smem>>
    %375 = vector.broadcast %374 : f32 to vector<1x256xf32>
    %376 = arith.mulf %375, %113 : vector<1x256xf32>
    %377 = arith.addf %373, %376 : vector<1x256xf32>
    %c74 = arith.constant 74 : index
    %378 = memref.load %arg1[%c74] : memref<98xf32, #tpu.memory_space<smem>>
    %379 = vector.broadcast %378 : f32 to vector<1x256xf32>
    %380 = arith.mulf %379, %118 : vector<1x256xf32>
    %381 = arith.addf %377, %380 : vector<1x256xf32>
    %c26 = arith.constant 26 : index
    %382 = memref.load %arg1[%c26] : memref<98xf32, #tpu.memory_space<smem>>
    %383 = vector.broadcast %382 : f32 to vector<1x256xf32>
    %384 = arith.mulf %383, %132 : vector<1x256xf32>
    %385 = arith.addf %381, %384 : vector<1x256xf32>
    %c75 = arith.constant 75 : index
    %386 = memref.load %arg1[%c75] : memref<98xf32, #tpu.memory_space<smem>>
    %387 = vector.broadcast %386 : f32 to vector<1x256xf32>
    %388 = arith.mulf %387, %137 : vector<1x256xf32>
    %389 = arith.addf %385, %388 : vector<1x256xf32>
    %c27 = arith.constant 27 : index
    %390 = memref.load %arg1[%c27] : memref<98xf32, #tpu.memory_space<smem>>
    %391 = vector.broadcast %390 : f32 to vector<1x256xf32>
    %392 = arith.mulf %391, %151 : vector<1x256xf32>
    %393 = arith.addf %389, %392 : vector<1x256xf32>
    %c76 = arith.constant 76 : index
    %394 = memref.load %arg1[%c76] : memref<98xf32, #tpu.memory_space<smem>>
    %395 = vector.broadcast %394 : f32 to vector<1x256xf32>
    %396 = arith.mulf %395, %156 : vector<1x256xf32>
    %397 = arith.addf %393, %396 : vector<1x256xf32>
    %398 = arith.addf %340, %397 : vector<1x256xf32>
    %cst_67 = arith.constant 0.000000e+00 : f32
    %399 = vector.broadcast %cst_67 : f32 to vector<1x256xf32>
    %c28 = arith.constant 28 : index
    %400 = memref.load %arg1[%c28] : memref<98xf32, #tpu.memory_space<smem>>
    %401 = vector.broadcast %400 : f32 to vector<1x256xf32>
    %402 = arith.mulf %401, %43 : vector<1x256xf32>
    %403 = arith.addf %399, %402 : vector<1x256xf32>
    %c77 = arith.constant 77 : index
    %404 = memref.load %arg1[%c77] : memref<98xf32, #tpu.memory_space<smem>>
    %405 = vector.broadcast %404 : f32 to vector<1x256xf32>
    %406 = arith.mulf %405, %48 : vector<1x256xf32>
    %407 = arith.addf %403, %406 : vector<1x256xf32>
    %c29 = arith.constant 29 : index
    %408 = memref.load %arg1[%c29] : memref<98xf32, #tpu.memory_space<smem>>
    %409 = vector.broadcast %408 : f32 to vector<1x256xf32>
    %410 = arith.mulf %409, %62 : vector<1x256xf32>
    %411 = arith.addf %407, %410 : vector<1x256xf32>
    %c78 = arith.constant 78 : index
    %412 = memref.load %arg1[%c78] : memref<98xf32, #tpu.memory_space<smem>>
    %413 = vector.broadcast %412 : f32 to vector<1x256xf32>
    %414 = arith.mulf %413, %67 : vector<1x256xf32>
    %415 = arith.addf %411, %414 : vector<1x256xf32>
    %c30 = arith.constant 30 : index
    %416 = memref.load %arg1[%c30] : memref<98xf32, #tpu.memory_space<smem>>
    %417 = vector.broadcast %416 : f32 to vector<1x256xf32>
    %418 = arith.mulf %417, %81 : vector<1x256xf32>
    %419 = arith.addf %415, %418 : vector<1x256xf32>
    %c79 = arith.constant 79 : index
    %420 = memref.load %arg1[%c79] : memref<98xf32, #tpu.memory_space<smem>>
    %421 = vector.broadcast %420 : f32 to vector<1x256xf32>
    %422 = arith.mulf %421, %86 : vector<1x256xf32>
    %423 = arith.addf %419, %422 : vector<1x256xf32>
    %c31 = arith.constant 31 : index
    %424 = memref.load %arg1[%c31] : memref<98xf32, #tpu.memory_space<smem>>
    %425 = vector.broadcast %424 : f32 to vector<1x256xf32>
    %426 = arith.mulf %425, %97 : vector<1x256xf32>
    %427 = arith.addf %423, %426 : vector<1x256xf32>
    %c80 = arith.constant 80 : index
    %428 = memref.load %arg1[%c80] : memref<98xf32, #tpu.memory_space<smem>>
    %429 = vector.broadcast %428 : f32 to vector<1x256xf32>
    %430 = arith.mulf %429, %99 : vector<1x256xf32>
    %431 = arith.addf %427, %430 : vector<1x256xf32>
    %c32 = arith.constant 32 : index
    %432 = memref.load %arg1[%c32] : memref<98xf32, #tpu.memory_space<smem>>
    %433 = vector.broadcast %432 : f32 to vector<1x256xf32>
    %434 = arith.mulf %433, %113 : vector<1x256xf32>
    %435 = arith.addf %431, %434 : vector<1x256xf32>
    %c81 = arith.constant 81 : index
    %436 = memref.load %arg1[%c81] : memref<98xf32, #tpu.memory_space<smem>>
    %437 = vector.broadcast %436 : f32 to vector<1x256xf32>
    %438 = arith.mulf %437, %118 : vector<1x256xf32>
    %439 = arith.addf %435, %438 : vector<1x256xf32>
    %c33 = arith.constant 33 : index
    %440 = memref.load %arg1[%c33] : memref<98xf32, #tpu.memory_space<smem>>
    %441 = vector.broadcast %440 : f32 to vector<1x256xf32>
    %442 = arith.mulf %441, %132 : vector<1x256xf32>
    %443 = arith.addf %439, %442 : vector<1x256xf32>
    %c82 = arith.constant 82 : index
    %444 = memref.load %arg1[%c82] : memref<98xf32, #tpu.memory_space<smem>>
    %445 = vector.broadcast %444 : f32 to vector<1x256xf32>
    %446 = arith.mulf %445, %137 : vector<1x256xf32>
    %447 = arith.addf %443, %446 : vector<1x256xf32>
    %c34 = arith.constant 34 : index
    %448 = memref.load %arg1[%c34] : memref<98xf32, #tpu.memory_space<smem>>
    %449 = vector.broadcast %448 : f32 to vector<1x256xf32>
    %450 = arith.mulf %449, %151 : vector<1x256xf32>
    %451 = arith.addf %447, %450 : vector<1x256xf32>
    %c83 = arith.constant 83 : index
    %452 = memref.load %arg1[%c83] : memref<98xf32, #tpu.memory_space<smem>>
    %453 = vector.broadcast %452 : f32 to vector<1x256xf32>
    %454 = arith.mulf %453, %156 : vector<1x256xf32>
    %455 = arith.addf %451, %454 : vector<1x256xf32>
    %cst_68 = arith.constant 0.000000e+00 : f32
    %456 = vector.broadcast %cst_68 : f32 to vector<1x16xf32>
    %457 = vector.extract_strided_slice %455 {offsets = [0, 16], sizes = [1, 240], strides = [1, 1]} : vector<1x256xf32> to vector<1x240xf32>
    %458 = tpu.concatenate %457, %456 in 1 : vector<1x240xf32>, vector<1x16xf32> -> vector<1x256xf32>
    %459 = arith.addf %398, %458 : vector<1x256xf32>
    %cst_69 = arith.constant 0.000000e+00 : f32
    %460 = vector.broadcast %cst_69 : f32 to vector<1x256xf32>
    %c35 = arith.constant 35 : index
    %461 = memref.load %arg1[%c35] : memref<98xf32, #tpu.memory_space<smem>>
    %462 = vector.broadcast %461 : f32 to vector<1x256xf32>
    %463 = arith.mulf %462, %43 : vector<1x256xf32>
    %464 = arith.addf %460, %463 : vector<1x256xf32>
    %c84 = arith.constant 84 : index
    %465 = memref.load %arg1[%c84] : memref<98xf32, #tpu.memory_space<smem>>
    %466 = vector.broadcast %465 : f32 to vector<1x256xf32>
    %467 = arith.mulf %466, %48 : vector<1x256xf32>
    %468 = arith.addf %464, %467 : vector<1x256xf32>
    %c36 = arith.constant 36 : index
    %469 = memref.load %arg1[%c36] : memref<98xf32, #tpu.memory_space<smem>>
    %470 = vector.broadcast %469 : f32 to vector<1x256xf32>
    %471 = arith.mulf %470, %62 : vector<1x256xf32>
    %472 = arith.addf %468, %471 : vector<1x256xf32>
    %c85 = arith.constant 85 : index
    %473 = memref.load %arg1[%c85] : memref<98xf32, #tpu.memory_space<smem>>
    %474 = vector.broadcast %473 : f32 to vector<1x256xf32>
    %475 = arith.mulf %474, %67 : vector<1x256xf32>
    %476 = arith.addf %472, %475 : vector<1x256xf32>
    %c37 = arith.constant 37 : index
    %477 = memref.load %arg1[%c37] : memref<98xf32, #tpu.memory_space<smem>>
    %478 = vector.broadcast %477 : f32 to vector<1x256xf32>
    %479 = arith.mulf %478, %81 : vector<1x256xf32>
    %480 = arith.addf %476, %479 : vector<1x256xf32>
    %c86 = arith.constant 86 : index
    %481 = memref.load %arg1[%c86] : memref<98xf32, #tpu.memory_space<smem>>
    %482 = vector.broadcast %481 : f32 to vector<1x256xf32>
    %483 = arith.mulf %482, %86 : vector<1x256xf32>
    %484 = arith.addf %480, %483 : vector<1x256xf32>
    %c38 = arith.constant 38 : index
    %485 = memref.load %arg1[%c38] : memref<98xf32, #tpu.memory_space<smem>>
    %486 = vector.broadcast %485 : f32 to vector<1x256xf32>
    %487 = arith.mulf %486, %97 : vector<1x256xf32>
    %488 = arith.addf %484, %487 : vector<1x256xf32>
    %c87 = arith.constant 87 : index
    %489 = memref.load %arg1[%c87] : memref<98xf32, #tpu.memory_space<smem>>
    %490 = vector.broadcast %489 : f32 to vector<1x256xf32>
    %491 = arith.mulf %490, %99 : vector<1x256xf32>
    %492 = arith.addf %488, %491 : vector<1x256xf32>
    %c39 = arith.constant 39 : index
    %493 = memref.load %arg1[%c39] : memref<98xf32, #tpu.memory_space<smem>>
    %494 = vector.broadcast %493 : f32 to vector<1x256xf32>
    %495 = arith.mulf %494, %113 : vector<1x256xf32>
    %496 = arith.addf %492, %495 : vector<1x256xf32>
    %c88 = arith.constant 88 : index
    %497 = memref.load %arg1[%c88] : memref<98xf32, #tpu.memory_space<smem>>
    %498 = vector.broadcast %497 : f32 to vector<1x256xf32>
    %499 = arith.mulf %498, %118 : vector<1x256xf32>
    %500 = arith.addf %496, %499 : vector<1x256xf32>
    %c40 = arith.constant 40 : index
    %501 = memref.load %arg1[%c40] : memref<98xf32, #tpu.memory_space<smem>>
    %502 = vector.broadcast %501 : f32 to vector<1x256xf32>
    %503 = arith.mulf %502, %132 : vector<1x256xf32>
    %504 = arith.addf %500, %503 : vector<1x256xf32>
    %c89 = arith.constant 89 : index
    %505 = memref.load %arg1[%c89] : memref<98xf32, #tpu.memory_space<smem>>
    %506 = vector.broadcast %505 : f32 to vector<1x256xf32>
    %507 = arith.mulf %506, %137 : vector<1x256xf32>
    %508 = arith.addf %504, %507 : vector<1x256xf32>
    %c41 = arith.constant 41 : index
    %509 = memref.load %arg1[%c41] : memref<98xf32, #tpu.memory_space<smem>>
    %510 = vector.broadcast %509 : f32 to vector<1x256xf32>
    %511 = arith.mulf %510, %151 : vector<1x256xf32>
    %512 = arith.addf %508, %511 : vector<1x256xf32>
    %c90 = arith.constant 90 : index
    %513 = memref.load %arg1[%c90] : memref<98xf32, #tpu.memory_space<smem>>
    %514 = vector.broadcast %513 : f32 to vector<1x256xf32>
    %515 = arith.mulf %514, %156 : vector<1x256xf32>
    %516 = arith.addf %512, %515 : vector<1x256xf32>
    %cst_70 = arith.constant 0.000000e+00 : f32
    %517 = vector.broadcast %cst_70 : f32 to vector<1x32xf32>
    %518 = vector.extract_strided_slice %516 {offsets = [0, 32], sizes = [1, 224], strides = [1, 1]} : vector<1x256xf32> to vector<1x224xf32>
    %519 = tpu.concatenate %518, %517 in 1 : vector<1x224xf32>, vector<1x32xf32> -> vector<1x256xf32>
    %520 = arith.addf %459, %519 : vector<1x256xf32>
    %cst_71 = arith.constant 0.000000e+00 : f32
    %521 = vector.broadcast %cst_71 : f32 to vector<1x256xf32>
    %c42 = arith.constant 42 : index
    %522 = memref.load %arg1[%c42] : memref<98xf32, #tpu.memory_space<smem>>
    %523 = vector.broadcast %522 : f32 to vector<1x256xf32>
    %524 = arith.mulf %523, %43 : vector<1x256xf32>
    %525 = arith.addf %521, %524 : vector<1x256xf32>
    %c91 = arith.constant 91 : index
    %526 = memref.load %arg1[%c91] : memref<98xf32, #tpu.memory_space<smem>>
    %527 = vector.broadcast %526 : f32 to vector<1x256xf32>
    %528 = arith.mulf %527, %48 : vector<1x256xf32>
    %529 = arith.addf %525, %528 : vector<1x256xf32>
    %c43 = arith.constant 43 : index
    %530 = memref.load %arg1[%c43] : memref<98xf32, #tpu.memory_space<smem>>
    %531 = vector.broadcast %530 : f32 to vector<1x256xf32>
    %532 = arith.mulf %531, %62 : vector<1x256xf32>
    %533 = arith.addf %529, %532 : vector<1x256xf32>
    %c92 = arith.constant 92 : index
    %534 = memref.load %arg1[%c92] : memref<98xf32, #tpu.memory_space<smem>>
    %535 = vector.broadcast %534 : f32 to vector<1x256xf32>
    %536 = arith.mulf %535, %67 : vector<1x256xf32>
    %537 = arith.addf %533, %536 : vector<1x256xf32>
    %c44 = arith.constant 44 : index
    %538 = memref.load %arg1[%c44] : memref<98xf32, #tpu.memory_space<smem>>
    %539 = vector.broadcast %538 : f32 to vector<1x256xf32>
    %540 = arith.mulf %539, %81 : vector<1x256xf32>
    %541 = arith.addf %537, %540 : vector<1x256xf32>
    %c93 = arith.constant 93 : index
    %542 = memref.load %arg1[%c93] : memref<98xf32, #tpu.memory_space<smem>>
    %543 = vector.broadcast %542 : f32 to vector<1x256xf32>
    %544 = arith.mulf %543, %86 : vector<1x256xf32>
    %545 = arith.addf %541, %544 : vector<1x256xf32>
    %c45 = arith.constant 45 : index
    %546 = memref.load %arg1[%c45] : memref<98xf32, #tpu.memory_space<smem>>
    %547 = vector.broadcast %546 : f32 to vector<1x256xf32>
    %548 = arith.mulf %547, %97 : vector<1x256xf32>
    %549 = arith.addf %545, %548 : vector<1x256xf32>
    %c94 = arith.constant 94 : index
    %550 = memref.load %arg1[%c94] : memref<98xf32, #tpu.memory_space<smem>>
    %551 = vector.broadcast %550 : f32 to vector<1x256xf32>
    %552 = arith.mulf %551, %99 : vector<1x256xf32>
    %553 = arith.addf %549, %552 : vector<1x256xf32>
    %c46 = arith.constant 46 : index
    %554 = memref.load %arg1[%c46] : memref<98xf32, #tpu.memory_space<smem>>
    %555 = vector.broadcast %554 : f32 to vector<1x256xf32>
    %556 = arith.mulf %555, %113 : vector<1x256xf32>
    %557 = arith.addf %553, %556 : vector<1x256xf32>
    %c95 = arith.constant 95 : index
    %558 = memref.load %arg1[%c95] : memref<98xf32, #tpu.memory_space<smem>>
    %559 = vector.broadcast %558 : f32 to vector<1x256xf32>
    %560 = arith.mulf %559, %118 : vector<1x256xf32>
    %561 = arith.addf %557, %560 : vector<1x256xf32>
    %c47 = arith.constant 47 : index
    %562 = memref.load %arg1[%c47] : memref<98xf32, #tpu.memory_space<smem>>
    %563 = vector.broadcast %562 : f32 to vector<1x256xf32>
    %564 = arith.mulf %563, %132 : vector<1x256xf32>
    %565 = arith.addf %561, %564 : vector<1x256xf32>
    %c96 = arith.constant 96 : index
    %566 = memref.load %arg1[%c96] : memref<98xf32, #tpu.memory_space<smem>>
    %567 = vector.broadcast %566 : f32 to vector<1x256xf32>
    %568 = arith.mulf %567, %137 : vector<1x256xf32>
    %569 = arith.addf %565, %568 : vector<1x256xf32>
    %c48 = arith.constant 48 : index
    %570 = memref.load %arg1[%c48] : memref<98xf32, #tpu.memory_space<smem>>
    %571 = vector.broadcast %570 : f32 to vector<1x256xf32>
    %572 = arith.mulf %571, %151 : vector<1x256xf32>
    %573 = arith.addf %569, %572 : vector<1x256xf32>
    %c97 = arith.constant 97 : index
    %574 = memref.load %arg1[%c97] : memref<98xf32, #tpu.memory_space<smem>>
    %575 = vector.broadcast %574 : f32 to vector<1x256xf32>
    %576 = arith.mulf %575, %156 : vector<1x256xf32>
    %577 = arith.addf %573, %576 : vector<1x256xf32>
    %cst_72 = arith.constant 0.000000e+00 : f32
    %578 = vector.broadcast %cst_72 : f32 to vector<1x48xf32>
    %579 = vector.extract_strided_slice %577 {offsets = [0, 48], sizes = [1, 208], strides = [1, 1]} : vector<1x256xf32> to vector<1x208xf32>
    %580 = tpu.concatenate %579, %578 in 1 : vector<1x208xf32>, vector<1x48xf32> -> vector<1x256xf32>
    %581 = arith.addf %520, %580 : vector<1x256xf32>
    %cst_73 = arith.constant 0.000000e+00 : f32
    %582 = vector.broadcast %cst_73 : f32 to vector<1x256xf32>
    %583 = arith.subf %582, %581 : vector<1x256xf32>
    %584 = math.exp %583 : vector<1x256xf32>
    %cst_74 = arith.constant 1.000000e+00 : f32
    %585 = vector.broadcast %cst_74 : f32 to vector<1x256xf32>
    %586 = arith.addf %585, %584 : vector<1x256xf32>
    %cst_75 = arith.constant 1.000000e+00 : f32
    %587 = vector.broadcast %cst_75 : f32 to vector<1x256xf32>
    %588 = arith.divf %587, %586 : vector<1x256xf32>
    %589 = vector.shape_cast %588 : vector<1x256xf32> to vector<1x1x256xf32>
    %c0_76 = arith.constant 0 : index
    %c0_77 = arith.constant 0 : index
    %c0_78 = arith.constant 0 : index
    %590 = vector.load %arg2[%c0_76, %c0_77, %c0_78] : memref<1x4x256xf32, #tpu.memory_space<vmem>>, vector<1x4x256xf32>
    %591 = vector.broadcast %589 : vector<1x1x256xf32> to vector<1x4x256xf32>
    %592 = arith.mulf %590, %591 : vector<1x4x256xf32>
    %c0_79 = arith.constant 0 : index
    %c0_80 = arith.constant 0 : index
    %c0_81 = arith.constant 0 : index
    %593 = vector.load %arg3[%c0_79, %c0_80, %c0_81] : memref<1x4x256xf32, #tpu.memory_space<vmem>>, vector<1x4x256xf32>
    tpu.vector_store %arg3[%c0_79, %c0_80, %c0_81], %592 {strides = array<i32>} : memref<1x4x256xf32, #tpu.memory_space<vmem>>, vector<1x4x256xf32>,
    return
  }
  func.func @transform_0(%arg0: i32) -> i32 {
    %c0_i32 = arith.constant 0 : i32
    %c0_i32_0 = arith.constant 0 : i32
    return %c0_i32 : i32
  }
  func.func @transform_1(%arg0: i32) -> (i32, i32, i32) {
    %c0_i32 = arith.constant 0 : i32
    %c0_i32_0 = arith.constant 0 : i32
    %c0_i32_1 = arith.constant 0 : i32
    return %arg0, %c0_i32, %c0_i32_0 : i32, i32, i32
  }
  func.func @transform_2(%arg0: i32) -> (i32, i32, i32) {
    %c0_i32 = arith.constant 0 : i32
    %c0_i32_0 = arith.constant 0 : i32
    %c0_i32_1 = arith.constant 0 : i32
    return %arg0, %c0_i32, %c0_i32_0 : i32, i32, i32
  }
}

</mosaic_0001>

<llo_original>
// kernel: spatial_attention.1
$region0: #{spatial_attention.1}
  #allocation0 [shape = 'u32[]', space=smem, size = 0x4, offset = 0x4, fixed_abs, tag = 'smem constant byte address 0x4 - core index']
  #allocation1 [shape = 'u32[144,128]{1,0:T(1,128)}', space=vmem, size = 0x12000, scoped, tag = 'internal scratch']
  %s0 = inlined_call_operand.vmem [shape: f32[98], index: 0, kind: input, shape index: {}]
  %s1 = inlined_call_operand.vmem [shape: f32[2,4,256], index: 1, kind: input, shape index: {}]
  %s2 = inlined_call_operand.vmem [shape: f32[2,4,256], index: 2, kind: output, shape index: {}]
  %s3 = sld [smem:[#allocation0]]
  $region45: #{spatial_attention.1} parent=0
    _
  %s5 = ssub.s32 1, %s3
  %s6 = scalar_select 0, %s5, %s3
  $region1: #{spatial_attention.1} parent=0
    #allocation2 [shape = 'u8[512]{0}', space=smem, size = 0x200, scoped, tag = 'input window, operand 0, single buffered']
    #allocation3 [shape = 's32[2]{0}', space=sflag, size = 0x8, scoped, tag = 'scoped memory for spatial_attention.1']
    %7 = vsyncpa [#allocation3], 0
    loop: start=0, step=1, limit=4
    $region2: #{spatial_attention.1} parent=1 // loop_pre_header
      _
    $region3: #{spatial_attention.1} parent=1 // loop_header
      %s9 = sphi 0, %s13
      %p10 = scmp.ge.s32.totalorder %s9, 4
      %s17 = sphi 0, %s17
      %s19 = sphi 0, %s17
      %s20 = sphi 0, %s19
      %s34 = sphi 0, %s20
      %s40 = sphi 0, %s42
      %s43 = sphi 0, %s40
      %s44 = sphi 0, %s43
      %s60 = sphi 0, %s44
      %s66 = sphi 0, %s68
      %s69 = sphi 0, %s66
      %s70 = sphi 0, %s69
      %s86 = sphi 0, %s70
    $region4: #{spatial_attention.1} parent=1 // loop_header_branch
      %12 = sbr.rel (%p10) target = $region8
    $region5: #{spatial_attention.1} parent=1 // loop_body
      %s14 = ssub.s32 %s9, 1
      %s15 = ssub.s32 %s9, 2
      %s16 = sadd.s32 %s9, 1
      %s18 = sadd.s32 %s17, 1
      %p21 = scmp.eq.s32.totalorder %s9, 1
      %p22 = scmp.ne.s32.totalorder %s17, %s19
      %p23 = scmp.eq.s32.totalorder %s9, 0
      %p24 = por %p22, %p23
      %p25 = scmp.ne.s32.totalorder %s17, %s19
      %p26 = scmp.eq.s32.totalorder %s14, 1
      %p27 = por %p25, %p26
      %p28 = scmp.ne.s32.totalorder %s19, %s20
      %p29 = scmp.eq.s32.totalorder %s14, 0
      %p30 = por %p28, %p29
      %p31 = scmp.ne.s32.totalorder %s19, %s20
      %p32 = scmp.eq.s32.totalorder %s15, 1
      %p33 = por %p31, %p32
      %p35 = scmp.ne.s32.totalorder %s20, %s34
      %p36 = scmp.eq.s32.totalorder %s15, 0
      %p37 = por %p35, %p36
      %s38 = ssub.s32 %s9, %s16
      %p39 = scmp.eq.s32.totalorder %s38, 0
      %s41 = sadd.s32 %s40, 1
      %s42 = scalar_select %p39, %s40, %s41
      %p45 = pneg %p39
      %p46 = scmp.eq.s32.totalorder %s9, 1
      %p47 = por %p45, %p46
      %p48 = scmp.ne.s32.totalorder %s40, %s43
      %p49 = scmp.eq.s32.totalorder %s9, 0
      %p50 = por %p48, %p49
      %p51 = scmp.ne.s32.totalorder %s40, %s43
      %p52 = scmp.eq.s32.totalorder %s14, 1
      %p53 = por %p51, %p52
      %p54 = scmp.ne.s32.totalorder %s43, %s44
      %p55 = scmp.eq.s32.totalorder %s14, 0
      %p56 = por %p54, %p55
      %p57 = scmp.ne.s32.totalorder %s43, %s44
      %p58 = scmp.eq.s32.totalorder %s15, 1
      %p59 = por %p57, %p58
      %p61 = scmp.ne.s32.totalorder %s44, %s60
      %p62 = scmp.eq.s32.totalorder %s15, 0
      %p63 = por %p61, %p62
      %s64 = ssub.s32 %s9, %s16
      %p65 = scmp.eq.s32.totalorder %s64, 0
      %s67 = sadd.s32 %s66, 1
      %s68 = scalar_select %p65, %s66, %s67
      %p71 = pneg %p65
      %p72 = scmp.eq.s32.totalorder %s9, 1
      %p73 = por %p71, %p72
      %p74 = scmp.ne.s32.totalorder %s66, %s69
      %p75 = scmp.eq.s32.totalorder %s9, 0
      %p76 = por %p74, %p75
      %p77 = scmp.ne.s32.totalorder %s66, %s69
      %p78 = scmp.eq.s32.totalorder %s14, 1
      %p79 = por %p77, %p78
      %p80 = scmp.ne.s32.totalorder %s69, %s70
      %p81 = scmp.eq.s32.totalorder %s14, 0
      %p82 = por %p80, %p81
      %p83 = scmp.ne.s32.totalorder %s69, %s70
      %p84 = scmp.eq.s32.totalorder %s15, 1
      %p85 = por %p83, %p84
      %p87 = scmp.ne.s32.totalorder %s70, %s86
      %p88 = scmp.eq.s32.totalorder %s15, 0
      %p89 = por %p87, %p88
      %p90 = scmp.le.s32.totalorder 1, %s9
      %p91 = scmp.lt.s32.totalorder %s9, 3
      %p92 = pnand %p90, %p91
      %p93 = pneg %p92
      // Predicated region
      $region9: #{spatial_attention.1} parent=5 // pred_check
        _
      $region10: #{spatial_attention.1} parent=5 // pred_check_branch
        %95 = sbr.rel (%p92) target = $region12
      $region11: #{spatial_attention.1} parent=5 // pred_region
        %s96 = ssub.s32 %s9, 1
        // Predicated region
        $region13: #{spatial_attention.1} parent=11 // pred_check
          %p97 = pneg %p30
        $region14: #{spatial_attention.1} parent=11 // pred_check_branch
          %99 = sbr.rel (%p97) target = $region16
        $region15: #{spatial_attention.1} parent=11 // pred_region
          %s101 = ssub.s32 16, 16
          %102 = vsyncadd [#allocation3], %s101
          %s104 = sshll.u32 %s0, 4
          %s105 = int_to_ptr.vmem [resolvable:$true] %s104
          %107 = dma.vmem_to_smem %s105, 16, [#allocation2], [#allocation3]
        $region16: #{spatial_attention.1} parent=11 // pred_fallthru
          _
      $region12: #{spatial_attention.1} parent=5 // pred_fallthru
        _
      %p108 = scmp.lt.s32.totalorder %s9, 2
      // Predicated region
      $region17: #{spatial_attention.1} parent=5 // pred_check
        %p109 = pneg %p108
      $region18: #{spatial_attention.1} parent=5 // pred_check_branch
        %111 = sbr.rel (%p109) target = $region20
      $region19: #{spatial_attention.1} parent=5 // pred_region
        // Predicated region
        $region21: #{spatial_attention.1} parent=19 // pred_check
          %p112 = pneg %p50
        $region22: #{spatial_attention.1} parent=19 // pred_check_branch
          %114 = sbr.rel (%p112) target = $region24
        $region23: #{spatial_attention.1} parent=19 // pred_region
          %p115 = scmp.lt.s32.totalorder %s9, 1
          %s116 = scalar_select %p115, %s9, 1
          %s117 = smul.addr %s116, 2
          %s118 = smul.addr %s117, 4
          %s119 = scalar_lea.vmem %s1, %s118
        $region24: #{spatial_attention.1} parent=19 // pred_fallthru
          _
      $region20: #{spatial_attention.1} parent=5 // pred_fallthru
        _
      %p120 = scmp.le.s32.totalorder 1, %s9
      %p121 = scmp.lt.s32.totalorder %s9, 3
      %p122 = pnand %p120, %p121
      %p123 = pneg %p122
      // Predicated region
      $region25: #{spatial_attention.1} parent=5 // pred_check
        _
      $region26: #{spatial_attention.1} parent=5 // pred_check_branch
        %125 = sbr.rel (%p122) target = $region28
      $region27: #{spatial_attention.1} parent=5 // pred_region
        %s126 = ssub.s32 %s9, 1
        // Predicated region
        $region29: #{spatial_attention.1} parent=27 // pred_check
          %p127 = pneg %p30
        $region30: #{spatial_attention.1} parent=27 // pred_check_branch
          %129 = sbr.rel (%p127) target = $region32
        $region31: #{spatial_attention.1} parent=27 // pred_region
          %130 = dma.done [#allocation3], 16
        $region32: #{spatial_attention.1} parent=27 // pred_fallthru
          _
        %131 = sfence
        %p132 = pneg %p30
        %p133 = pneg %p27
        %p134 = scmp.lt.s32.totalorder %s14, 1
        %s135 = scalar_select %p134, %s14, 1
        %s136 = smul.addr %s135, 2
        %s137 = smul.addr %s136, 4
        %s138 = scalar_lea.vmem %s1, %s137
        %p139 = pneg %p56
        %p140 = pneg %p53
        %p141 = pneg %p82
        %p142 = pneg %p79
        %p143 = scmp.lt.s32.totalorder %s14, 1
        %s144 = scalar_select %p143, %s14, 1
        %s145 = smul.addr %s144, 2
        %s146 = smul.addr %s145, 4
        %s147 = scalar_lea.vmem %s2, %s146
        %p148 = scmp.lt.s32.totalorder %s14, 1
        %s149 = scalar_select %p148, %s14, 1
        %s150 = smul.addr %s149, 2
        %s151 = smul.addr %s150, 4
        %s152 = scalar_lea.vmem %s1, %s151
        %p153 = scmp.lt.s32.totalorder %s14, 1
        %s154 = scalar_select %p153, %s14, 1
        %s155 = smul.addr %s154, 2
        %s156 = smul.addr %s155, 4
        %s157 = scalar_lea.vmem %s2, %s156
        %v158 = vld [vmem:[%s152] sm:$0xff]
        %v160 = vcombine.high %v158, %v158
        %vm162 = vcmask 1043456
        %v163 = vsel %vm162, %v158, 0.0
        %v164 = vrot.slane %v163, 4
        %v165 = vadd.f32 %v163, %v164
        %v166 = vrot.slane %v165, 2
        %v167 = vadd.f32 %v165, %v166
        %v168 = vrot.slane %v167, 1
        %v169 = vadd.f32 %v167, %v168
        %v170 = vsel %vm162, %v160, 0.0
        %v171 = vrot.slane %v170, 4
        %v172 = vadd.f32 %v170, %v171
        %v173 = vrot.slane %v172, 2
        %v174 = vadd.f32 %v172, %v173
        %v175 = vrot.slane %v174, 1
        %v176 = vadd.f32 %v174, %v175
        %v177 = vadd.f32 %v169, 0.0
        %v178 = vadd.f32 %v176, 0.0
        %v179 = vsel %vm162, %v158, -inf
        %v180 = vrot.slane %v179, 4
        %v181 = vmax.f32 %v179, %v180
        %v182 = vrot.slane %v181, 2
        %v183 = vmax.f32 %v181, %v182
        %v184 = vrot.slane %v183, 1
        %v185 = vmax.f32 %v183, %v184
        %v186 = vsel %vm162, %v160, -inf
        %v187 = vrot.slane %v186, 4
        %v188 = vmax.f32 %v186, %v187
        %v189 = vrot.slane %v188, 2
        %v190 = vmax.f32 %v188, %v189
        %v191 = vrot.slane %v190, 1
        %v192 = vmax.f32 %v190, %v191
        %v193 = vmul.f32 %v177, 0.25
        %v194 = vmul.f32 %v178, 0.25
        %v195 = vlaneseq
        %v196 = vand.u32 %v195, 127
        %v197 = vadd.s32 %v196, 128
        %vm198 = vcmp.lt.s32.totalorder %v196, 0
        %v199 = vsub.s32 0, %v196
        %v200 = vsel %vm198, %v199, %v196
        %v201 = vshrl.u32 %v200, 4
        %v202 = vand.u32 %v200, 15
        %v203 = vsub.s32 0, %v202
        %v204 = vsel %vm198, %v203, %v202
        %vm205 = vcmp.lt.s32.totalorder %v197, 0
        %v206 = vsub.s32 0, %v197
        %v207 = vsel %vm205, %v206, %v197
        %v208 = vshrl.u32 %v207, 4
        %v209 = vand.u32 %v207, 15
        %v210 = vsub.s32 0, %v209
        %v211 = vsel %vm205, %v210, %v209
        %vm212 = vcmp.ne.s32.totalorder %v204, 0
        %vm213 = vcmp.ne.s32.totalorder %v211, 0
        %vm214 = vcmp.lt.s32.totalorder %v204, 0
        %vm215 = vcmp.lt.s32.totalorder %v211, 0
        %vm216 = vmand %vm214, %vm212
        %vm217 = vmand %vm215, %vm213
        %v218 = vadd.s32 %v204, 16
        %v219 = vadd.s32 %v211, 16
        %v220 = vsel %vm216, %v218, %v204
        %v221 = vsel %vm217, %v219, %v211
        %v222 = vadd.s32 %v220, 4294967293
        %v223 = vadd.s32 %v221, 4294967293
        %vm224 = vcmp.ge.s32.totalorder %v222, 0
        %vm225 = vcmp.ge.s32.totalorder %v223, 0
        %vm226 = vcmp.lt.s32.totalorder %v222, 16
        %vm227 = vcmp.lt.s32.totalorder %v223, 16
        %vm228 = vmand %vm224, %vm226
        %vm229 = vmand %vm225, %vm227
        %232 = vrot.lane.b32.xlu0 %v193, 3
        %v233 = vpop.permute.xlu0 %232
        %234 = vrot.lane.b32.xlu0 %v194, 3
        %v235 = vpop.permute.xlu0 %234
        %vm236 = vcmask 23552
        %v237 = vsel %vm236, %v233, %v235
        %v240 = vsel %vm236, 0.0, %v233
        %v241 = vsel %vm228, %v240, 0.0
        %v242 = vsel %vm229, %v237, 0.0
        %245 = vrot.lane.b32.xlu0 %v185, 3
        %v246 = vpop.permute.xlu0 %245
        %247 = vrot.lane.b32.xlu0 %v192, 3
        %v248 = vpop.permute.xlu0 %247
        %v249 = vsel %vm236, %v246, %v248
        %v252 = vsel %vm236, 0.0, %v246
        %v253 = vsel %vm228, %v252, 0.0
        %v254 = vsel %vm229, %v249, 0.0
        %v255 = vadd.s32 %v220, 4294967294
        %v256 = vadd.s32 %v221, 4294967294
        %vm257 = vcmp.ge.s32.totalorder %v255, 0
        %vm258 = vcmp.ge.s32.totalorder %v256, 0
        %vm259 = vcmp.lt.s32.totalorder %v255, 16
        %vm260 = vcmp.lt.s32.totalorder %v256, 16
        %vm261 = vmand %vm257, %vm259
        %vm262 = vmand %vm258, %vm260
        %263 = vrot.lane.b32.xlu0 %v193, 2
        %v264 = vpop.permute.xlu0 %263
        %265 = vrot.lane.b32.xlu0 %v194, 2
        %v266 = vpop.permute.xlu0 %265
        %vm267 = vcmask 15360
        %v268 = vsel %vm267, %v264, %v266
        %v271 = vsel %vm267, 0.0, %v264
        %v272 = vsel %vm261, %v271, 0.0
        %v273 = vsel %vm262, %v268, 0.0
        %274 = vrot.lane.b32.xlu0 %v185, 2
        %v275 = vpop.permute.xlu0 %274
        %276 = vrot.lane.b32.xlu0 %v192, 2
        %v277 = vpop.permute.xlu0 %276
        %v278 = vsel %vm267, %v275, %v277
        %v281 = vsel %vm267, 0.0, %v275
        %v282 = vsel %vm261, %v281, 0.0
        %v283 = vsel %vm262, %v278, 0.0
        %v284 = vadd.s32 %v220, 4294967295
        %v285 = vadd.s32 %v221, 4294967295
        %vm286 = vcmp.ge.s32.totalorder %v284, 0
        %vm287 = vcmp.ge.s32.totalorder %v285, 0
        %vm288 = vcmp.lt.s32.totalorder %v284, 16
        %vm289 = vcmp.lt.s32.totalorder %v285, 16
        %vm290 = vmand %vm286, %vm288
        %vm291 = vmand %vm287, %vm289
        %292 = vrot.lane.b32.xlu0 %v193, 1
        %v293 = vpop.permute.xlu0 %292
        %294 = vrot.lane.b32.xlu0 %v194, 1
        %v295 = vpop.permute.xlu0 %294
        %vm296 = vcmask 7168
        %v297 = vsel %vm296, %v293, %v295
        %v300 = vsel %vm296, 0.0, %v293
        %v301 = vsel %vm290, %v300, 0.0
        %v302 = vsel %vm291, %v297, 0.0
        %303 = vrot.lane.b32.xlu0 %v185, 1
        %v304 = vpop.permute.xlu0 %303
        %305 = vrot.lane.b32.xlu0 %v192, 1
        %v306 = vpop.permute.xlu0 %305
        %v307 = vsel %vm296, %v304, %v306
        %v310 = vsel %vm296, 0.0, %v304
        %v311 = vsel %vm290, %v310, 0.0
        %v312 = vsel %vm291, %v307, 0.0
        %vm313 = vcmp.ge.s32.totalorder %v220, 0
        %vm314 = vcmp.ge.s32.totalorder %v221, 0
        %vm315 = vcmp.lt.s32.totalorder %v220, 16
        %vm316 = vcmp.lt.s32.totalorder %v221, 16
        %vm317 = vmand %vm313, %vm315
        %vm318 = vmand %vm314, %vm316
        %v319 = vsel %vm317, %v193, 0.0
        %v320 = vsel %vm318, %v194, 0.0
        %v321 = vsel %vm317, %v185, 0.0
        %v322 = vsel %vm318, %v192, 0.0
        %v323 = vadd.s32 %v220, 1
        %v324 = vadd.s32 %v221, 1
        %vm325 = vcmp.ge.s32.totalorder %v323, 0
        %vm326 = vcmp.ge.s32.totalorder %v324, 0
        %vm327 = vcmp.lt.s32.totalorder %v323, 16
        %vm328 = vcmp.lt.s32.totalorder %v324, 16
        %vm329 = vmand %vm325, %vm327
        %vm330 = vmand %vm326, %vm328
        %331 = vrot.lane.b32.xlu0 %v193, 127
        %v332 = vpop.permute.xlu0 %331
        %333 = vrot.lane.b32.xlu0 %v194, 127
        %v334 = vpop.permute.xlu0 %333
        %vm335 = vcmask 1039360
        %v336 = vsel %vm335, %v332, %v334
        %v339 = vsel %vm335, %v334, 0.0
        %v340 = vsel %vm329, %v336, 0.0
        %v341 = vsel %vm330, %v339, 0.0
        %342 = vrot.lane.b32.xlu0 %v185, 127
        %v343 = vpop.permute.xlu0 %342
        %344 = vrot.lane.b32.xlu0 %v192, 127
        %v345 = vpop.permute.xlu0 %344
        %v346 = vsel %vm335, %v343, %v345
        %v349 = vsel %vm335, %v345, 0.0
        %v350 = vsel %vm329, %v346, 0.0
        %v351 = vsel %vm330, %v349, 0.0
        %v352 = vadd.s32 %v220, 2
        %v353 = vadd.s32 %v221, 2
        %vm354 = vcmp.ge.s32.totalorder %v352, 0
        %vm355 = vcmp.ge.s32.totalorder %v353, 0
        %vm356 = vcmp.lt.s32.totalorder %v352, 16
        %vm357 = vcmp.lt.s32.totalorder %v353, 16
        %vm358 = vmand %vm354, %vm356
        %vm359 = vmand %vm355, %vm357
        %360 = vrot.lane.b32.xlu0 %v193, 126
        %v361 = vpop.permute.xlu0 %360
        %362 = vrot.lane.b32.xlu0 %v194, 126
        %v363 = vpop.permute.xlu0 %362
        %vm364 = vcmask 1031168
        %v365 = vsel %vm364, %v361, %v363
        %v368 = vsel %vm364, %v363, 0.0
        %v369 = vsel %vm358, %v365, 0.0
        %v370 = vsel %vm359, %v368, 0.0
        %371 = vrot.lane.b32.xlu0 %v185, 126
        %v372 = vpop.permute.xlu0 %371
        %373 = vrot.lane.b32.xlu0 %v192, 126
        %v374 = vpop.permute.xlu0 %373
        %v375 = vsel %vm364, %v372, %v374
        %v378 = vsel %vm364, %v374, 0.0
        %v379 = vsel %vm358, %v375, 0.0
        %v380 = vsel %vm359, %v378, 0.0
        %v381 = vadd.s32 %v220, 3
        %v382 = vadd.s32 %v221, 3
        %vm383 = vcmp.ge.s32.totalorder %v381, 0
        %vm384 = vcmp.ge.s32.totalorder %v382, 0
        %vm385 = vcmp.lt.s32.totalorder %v381, 16
        %vm386 = vcmp.lt.s32.totalorder %v382, 16
        %vm387 = vmand %vm383, %vm385
        %vm388 = vmand %vm384, %vm386
        %389 = vrot.lane.b32.xlu0 %v193, 125
        %v390 = vpop.permute.xlu0 %389
        %391 = vrot.lane.b32.xlu0 %v194, 125
        %v392 = vpop.permute.xlu0 %391
        %vm393 = vcmask 1022976
        %v394 = vsel %vm393, %v390, %v392
        %v397 = vsel %vm393, %v392, 0.0
        %v398 = vsel %vm387, %v394, 0.0
        %v399 = vsel %vm388, %v397, 0.0
        %400 = vrot.lane.b32.xlu0 %v185, 125
        %v401 = vpop.permute.xlu0 %400
        %402 = vrot.lane.b32.xlu0 %v192, 125
        %v403 = vpop.permute.xlu0 %402
        %v404 = vsel %vm393, %v401, %v403
        %v407 = vsel %vm393, %v403, 0.0
        %v408 = vsel %vm387, %v404, 0.0
        %v409 = vsel %vm388, %v407, 0.0
        %s410 = sld [smem:[#allocation2]]
        %v411 = vstv %s410
        %v412 = vmul.f32 %v411, %v241
        %v413 = vmul.f32 %v411, %v242
        %v414 = vadd.f32 %v412, 0.0
        %v415 = vadd.f32 %v413, 0.0
        %s416 = sld [smem:[#allocation2 + $0x31]]
        %v417 = vstv %s416
        %v418 = vmul.f32 %v417, %v253
        %v419 = vmul.f32 %v417, %v254
        %v420 = vadd.f32 %v414, %v418
        %v421 = vadd.f32 %v415, %v419
        %s422 = sld [smem:[#allocation2 + $0x1]]
        %v423 = vstv %s422
        %v424 = vmul.f32 %v423, %v272
        %v425 = vmul.f32 %v423, %v273
        %v426 = vadd.f32 %v420, %v424
        %v427 = vadd.f32 %v421, %v425
        %s428 = sld [smem:[#allocation2 + $0x32]]
        %v429 = vstv %s428
        %v430 = vmul.f32 %v429, %v282
        %v431 = vmul.f32 %v429, %v283
        %v432 = vadd.f32 %v426, %v430
        %v433 = vadd.f32 %v427, %v431
        %s434 = sld [smem:[#allocation2 + $0x2]]
        %v435 = vstv %s434
        %v436 = vmul.f32 %v435, %v301
        %v437 = vmul.f32 %v435, %v302
        %v438 = vadd.f32 %v432, %v436
        %v439 = vadd.f32 %v433, %v437
        %s440 = sld [smem:[#allocation2 + $0x33]]
        %v441 = vstv %s440
        %v442 = vmul.f32 %v441, %v311
        %v443 = vmul.f32 %v441, %v312
        %v444 = vadd.f32 %v438, %v442
        %v445 = vadd.f32 %v439, %v443
        %s446 = sld [smem:[#allocation2 + $0x3]]
        %v447 = vstv %s446
        %v448 = vmul.f32 %v447, %v319
        %v449 = vmul.f32 %v447, %v320
        %v450 = vadd.f32 %v444, %v448
        %v451 = vadd.f32 %v445, %v449
        %s452 = sld [smem:[#allocation2 + $0x34]]
        %v453 = vstv %s452
        %v454 = vmul.f32 %v453, %v321
        %v455 = vmul.f32 %v453, %v322
        %v456 = vadd.f32 %v450, %v454
        %v457 = vadd.f32 %v451, %v455
        %s458 = sld [smem:[#allocation2 + $0x4]]
        %v459 = vstv %s458
        %v460 = vmul.f32 %v459, %v340
        %v461 = vmul.f32 %v459, %v341
        %v462 = vadd.f32 %v456, %v460
        %v463 = vadd.f32 %v457, %v461
        %s464 = sld [smem:[#allocation2 + $0x35]]
        %v465 = vstv %s464
        %v466 = vmul.f32 %v465, %v350
        %v467 = vmul.f32 %v465, %v351
        %v468 = vadd.f32 %v462, %v466
        %v469 = vadd.f32 %v463, %v467
        %s470 = sld [smem:[#allocation2 + $0x5]]
        %v471 = vstv %s470
        %v472 = vmul.f32 %v471, %v369
        %v473 = vmul.f32 %v471, %v370
        %v474 = vadd.f32 %v468, %v472
        %v475 = vadd.f32 %v469, %v473
        %s476 = sld [smem:[#allocation2 + $0x36]]
        %v477 = vstv %s476
        %v478 = vmul.f32 %v477, %v379
        %v479 = vmul.f32 %v477, %v380
        %v480 = vadd.f32 %v474, %v478
        %v481 = vadd.f32 %v475, %v479
        %s482 = sld [smem:[#allocation2 + $0x6]]
        %v483 = vstv %s482
        %v484 = vmul.f32 %v483, %v398
        %v485 = vmul.f32 %v483, %v399
        %v486 = vadd.f32 %v480, %v484
        %v487 = vadd.f32 %v481, %v485
        %s488 = sld [smem:[#allocation2 + $0x37]]
        %v489 = vstv %s488
        %v490 = vmul.f32 %v489, %v408
        %v491 = vmul.f32 %v489, %v409
        %v492 = vadd.f32 %v486, %v490
        %v493 = vadd.f32 %v487, %v491
        %496 = vrot.lane.b32.xlu0 %v492, 48
        %v497 = vpop.permute.xlu0 %496
        %498 = vrot.lane.b32.xlu0 %v493, 48
        %v499 = vpop.permute.xlu0 %498
        %vm500 = vcmask 392192
        %v501 = vsel %vm500, %v497, %v499
        %v504 = vsel %vm500, 0.0, %v497
        %v505 = vadd.f32 %v504, 0.0
        %v506 = vadd.f32 %v501, 0.0
        %s507 = sld [smem:[#allocation2 + $0x7]]
        %v508 = vstv %s507
        %v509 = vmul.f32 %v508, %v241
        %v510 = vmul.f32 %v508, %v242
        %v511 = vadd.f32 %v509, 0.0
        %v512 = vadd.f32 %v510, 0.0
        %s513 = sld [smem:[#allocation2 + $0x38]]
        %v514 = vstv %s513
        %v515 = vmul.f32 %v514, %v253
        %v516 = vmul.f32 %v514, %v254
        %v517 = vadd.f32 %v511, %v515
        %v518 = vadd.f32 %v512, %v516
        %s519 = sld [smem:[#allocation2 + $0x8]]
        %v520 = vstv %s519
        %v521 = vmul.f32 %v520, %v272
        %v522 = vmul.f32 %v520, %v273
        %v523 = vadd.f32 %v517, %v521
        %v524 = vadd.f32 %v518, %v522
        %s525 = sld [smem:[#allocation2 + $0x39]]
        %v526 = vstv %s525
        %v527 = vmul.f32 %v526, %v282
        %v528 = vmul.f32 %v526, %v283
        %v529 = vadd.f32 %v523, %v527
        %v530 = vadd.f32 %v524, %v528
        %s531 = sld [smem:[#allocation2 + $0x9]]
        %v532 = vstv %s531
        %v533 = vmul.f32 %v532, %v301
        %v534 = vmul.f32 %v532, %v302
        %v535 = vadd.f32 %v529, %v533
        %v536 = vadd.f32 %v530, %v534
        %s537 = sld [smem:[#allocation2 + $0x3a]]
        %v538 = vstv %s537
        %v539 = vmul.f32 %v538, %v311
        %v540 = vmul.f32 %v538, %v312
        %v541 = vadd.f32 %v535, %v539
        %v542 = vadd.f32 %v536, %v540
        %s543 = sld [smem:[#allocation2 + $0xa]]
        %v544 = vstv %s543
        %v545 = vmul.f32 %v544, %v319
        %v546 = vmul.f32 %v544, %v320
        %v547 = vadd.f32 %v541, %v545
        %v548 = vadd.f32 %v542, %v546
        %s549 = sld [smem:[#allocation2 + $0x3b]]
        %v550 = vstv %s549
        %v551 = vmul.f32 %v550, %v321
        %v552 = vmul.f32 %v550, %v322
        %v553 = vadd.f32 %v547, %v551
        %v554 = vadd.f32 %v548, %v552
        %s555 = sld [smem:[#allocation2 + $0xb]]
        %v556 = vstv %s555
        %v557 = vmul.f32 %v556, %v340
        %v558 = vmul.f32 %v556, %v341
        %v559 = vadd.f32 %v553, %v557
        %v560 = vadd.f32 %v554, %v558
        %s561 = sld [smem:[#allocation2 + $0x3c]]
        %v562 = vstv %s561
        %v563 = vmul.f32 %v562, %v350
        %v564 = vmul.f32 %v562, %v351
        %v565 = vadd.f32 %v559, %v563
        %v566 = vadd.f32 %v560, %v564
        %s567 = sld [smem:[#allocation2 + $0xc]]
        %v568 = vstv %s567
        %v569 = vmul.f32 %v568, %v369
        %v570 = vmul.f32 %v568, %v370
        %v571 = vadd.f32 %v565, %v569
        %v572 = vadd.f32 %v566, %v570
        %s573 = sld [smem:[#allocation2 + $0x3d]]
        %v574 = vstv %s573
        %v575 = vmul.f32 %v574, %v379
        %v576 = vmul.f32 %v574, %v380
        %v577 = vadd.f32 %v571, %v575
        %v578 = vadd.f32 %v572, %v576
        %s579 = sld [smem:[#allocation2 + $0xd]]
        %v580 = vstv %s579
        %v581 = vmul.f32 %v580, %v398
        %v582 = vmul.f32 %v580, %v399
        %v583 = vadd.f32 %v577, %v581
        %v584 = vadd.f32 %v578, %v582
        %s585 = sld [smem:[#allocation2 + $0x3e]]
        %v586 = vstv %s585
        %v587 = vmul.f32 %v586, %v408
        %v588 = vmul.f32 %v586, %v409
        %v589 = vadd.f32 %v583, %v587
        %v590 = vadd.f32 %v584, %v588
        %593 = vrot.lane.b32.xlu0 %v589, 32
        %v594 = vpop.permute.xlu0 %593
        %595 = vrot.lane.b32.xlu0 %v590, 32
        %v596 = vpop.permute.xlu0 %595
        %vm597 = vcmask 261120
        %v598 = vsel %vm597, %v594, %v596
        %v601 = vsel %vm597, 0.0, %v594
        %v602 = vadd.f32 %v505, %v601
        %v603 = vadd.f32 %v506, %v598
        %s604 = sld [smem:[#allocation2 + $0xe]]
        %v605 = vstv %s604
        %v606 = vmul.f32 %v605, %v241
        %v607 = vmul.f32 %v605, %v242
        %v608 = vadd.f32 %v606, 0.0
        %v609 = vadd.f32 %v607, 0.0
        %s610 = sld [smem:[#allocation2 + $0x3f]]
        %v611 = vstv %s610
        %v612 = vmul.f32 %v611, %v253
        %v613 = vmul.f32 %v611, %v254
        %v614 = vadd.f32 %v608, %v612
        %v615 = vadd.f32 %v609, %v613
        %s616 = sld [smem:[#allocation2 + $0xf]]
        %v617 = vstv %s616
        %v618 = vmul.f32 %v617, %v272
        %v619 = vmul.f32 %v617, %v273
        %v620 = vadd.f32 %v614, %v618
        %v621 = vadd.f32 %v615, %v619
        %s622 = sld [smem:[#allocation2 + $0x40]]
        %v623 = vstv %s622
        %v624 = vmul.f32 %v623, %v282
        %v625 = vmul.f32 %v623, %v283
        %v626 = vadd.f32 %v620, %v624
        %v627 = vadd.f32 %v621, %v625
        %s628 = sld [smem:[#allocation2 + $0x10]]
        %v629 = vstv %s628
        %v630 = vmul.f32 %v629, %v301
        %v631 = vmul.f32 %v629, %v302
        %v632 = vadd.f32 %v626, %v630
        %v633 = vadd.f32 %v627, %v631
        %s634 = sld [smem:[#allocation2 + $0x41]]
        %v635 = vstv %s634
        %v636 = vmul.f32 %v635, %v311
        %v637 = vmul.f32 %v635, %v312
        %v638 = vadd.f32 %v632, %v636
        %v639 = vadd.f32 %v633, %v637
        %s640 = sld [smem:[#allocation2 + $0x11]]
        %v641 = vstv %s640
        %v642 = vmul.f32 %v641, %v319
        %v643 = vmul.f32 %v641, %v320
        %v644 = vadd.f32 %v638, %v642
        %v645 = vadd.f32 %v639, %v643
        %s646 = sld [smem:[#allocation2 + $0x42]]
        %v647 = vstv %s646
        %v648 = vmul.f32 %v647, %v321
        %v649 = vmul.f32 %v647, %v322
        %v650 = vadd.f32 %v644, %v648
        %v651 = vadd.f32 %v645, %v649
        %s652 = sld [smem:[#allocation2 + $0x12]]
        %v653 = vstv %s652
        %v654 = vmul.f32 %v653, %v340
        %v655 = vmul.f32 %v653, %v341
        %v656 = vadd.f32 %v650, %v654
        %v657 = vadd.f32 %v651, %v655
        %s658 = sld [smem:[#allocation2 + $0x43]]
        %v659 = vstv %s658
        %v660 = vmul.f32 %v659, %v350
        %v661 = vmul.f32 %v659, %v351
        %v662 = vadd.f32 %v656, %v660
        %v663 = vadd.f32 %v657, %v661
        %s664 = sld [smem:[#allocation2 + $0x13]]
        %v665 = vstv %s664
        %v666 = vmul.f32 %v665, %v369
        %v667 = vmul.f32 %v665, %v370
        %v668 = vadd.f32 %v662, %v666
        %v669 = vadd.f32 %v663, %v667
        %s670 = sld [smem:[#allocation2 + $0x44]]
        %v671 = vstv %s670
        %v672 = vmul.f32 %v671, %v379
        %v673 = vmul.f32 %v671, %v380
        %v674 = vadd.f32 %v668, %v672
        %v675 = vadd.f32 %v669, %v673
        %s676 = sld [smem:[#allocation2 + $0x14]]
        %v677 = vstv %s676
        %v678 = vmul.f32 %v677, %v398
        %v679 = vmul.f32 %v677, %v399
        %v680 = vadd.f32 %v674, %v678
        %v681 = vadd.f32 %v675, %v679
        %s682 = sld [smem:[#allocation2 + $0x45]]
        %v683 = vstv %s682
        %v684 = vmul.f32 %v683, %v408
        %v685 = vmul.f32 %v683, %v409
        %v686 = vadd.f32 %v680, %v684
        %v687 = vadd.f32 %v681, %v685
        %690 = vrot.lane.b32.xlu0 %v686, 16
        %v691 = vpop.permute.xlu0 %690
        %692 = vrot.lane.b32.xlu0 %v687, 16
        %v693 = vpop.permute.xlu0 %692
        %vm694 = vcmask 130048
        %v695 = vsel %vm694, %v691, %v693
        %v698 = vsel %vm694, 0.0, %v691
        %v699 = vadd.f32 %v602, %v698
        %v700 = vadd.f32 %v603, %v695
        %s701 = sld [smem:[#allocation2 + $0x15]]
        %v702 = vstv %s701
        %v703 = vmul.f32 %v702, %v241
        %v704 = vmul.f32 %v702, %v242
        %v705 = vadd.f32 %v703, 0.0
        %v706 = vadd.f32 %v704, 0.0
        %s707 = sld [smem:[#allocation2 + $0x46]]
        %v708 = vstv %s707
        %v709 = vmul.f32 %v708, %v253
        %v710 = vmul.f32 %v708, %v254
        %v711 = vadd.f32 %v705, %v709
        %v712 = vadd.f32 %v706, %v710
        %s713 = sld [smem:[#allocation2 + $0x16]]
        %v714 = vstv %s713
        %v715 = vmul.f32 %v714, %v272
        %v716 = vmul.f32 %v714, %v273
        %v717 = vadd.f32 %v711, %v715
        %v718 = vadd.f32 %v712, %v716
        %s719 = sld [smem:[#allocation2 + $0x47]]
        %v720 = vstv %s719
        %v721 = vmul.f32 %v720, %v282
        %v722 = vmul.f32 %v720, %v283
        %v723 = vadd.f32 %v717, %v721
        %v724 = vadd.f32 %v718, %v722
        %s725 = sld [smem:[#allocation2 + $0x17]]
        %v726 = vstv %s725
        %v727 = vmul.f32 %v726, %v301
        %v728 = vmul.f32 %v726, %v302
        %v729 = vadd.f32 %v723, %v727
        %v730 = vadd.f32 %v724, %v728
        %s731 = sld [smem:[#allocation2 + $0x48]]
        %v732 = vstv %s731
        %v733 = vmul.f32 %v732, %v311
        %v734 = vmul.f32 %v732, %v312
        %v735 = vadd.f32 %v729, %v733
        %v736 = vadd.f32 %v730, %v734
        %s737 = sld [smem:[#allocation2 + $0x18]]
        %v738 = vstv %s737
        %v739 = vmul.f32 %v738, %v319
        %v740 = vmul.f32 %v738, %v320
        %v741 = vadd.f32 %v735, %v739
        %v742 = vadd.f32 %v736, %v740
        %s743 = sld [smem:[#allocation2 + $0x49]]
        %v744 = vstv %s743
        %v745 = vmul.f32 %v744, %v321
        %v746 = vmul.f32 %v744, %v322
        %v747 = vadd.f32 %v741, %v745
        %v748 = vadd.f32 %v742, %v746
        %s749 = sld [smem:[#allocation2 + $0x19]]
        %v750 = vstv %s749
        %v751 = vmul.f32 %v750, %v340
        %v752 = vmul.f32 %v750, %v341
        %v753 = vadd.f32 %v747, %v751
        %v754 = vadd.f32 %v748, %v752
        %s755 = sld [smem:[#allocation2 + $0x4a]]
        %v756 = vstv %s755
        %v757 = vmul.f32 %v756, %v350
        %v758 = vmul.f32 %v756, %v351
        %v759 = vadd.f32 %v753, %v757
        %v760 = vadd.f32 %v754, %v758
        %s761 = sld [smem:[#allocation2 + $0x1a]]
        %v762 = vstv %s761
        %v763 = vmul.f32 %v762, %v369
        %v764 = vmul.f32 %v762, %v370
        %v765 = vadd.f32 %v759, %v763
        %v766 = vadd.f32 %v760, %v764
        %s767 = sld [smem:[#allocation2 + $0x4b]]
        %v768 = vstv %s767
        %v769 = vmul.f32 %v768, %v379
        %v770 = vmul.f32 %v768, %v380
        %v771 = vadd.f32 %v765, %v769
        %v772 = vadd.f32 %v766, %v770
        %s773 = sld [smem:[#allocation2 + $0x1b]]
        %v774 = vstv %s773
        %v775 = vmul.f32 %v774, %v398
        %v776 = vmul.f32 %v774, %v399
        %v777 = vadd.f32 %v771, %v775
        %v778 = vadd.f32 %v772, %v776
        %s779 = sld [smem:[#allocation2 + $0x4c]]
        %v780 = vstv %s779
        %v781 = vmul.f32 %v780, %v408
        %v782 = vmul.f32 %v780, %v409
        %v783 = vadd.f32 %v777, %v781
        %v784 = vadd.f32 %v778, %v782
        %v785 = vadd.f32 %v699, %v783
        %v786 = vadd.f32 %v700, %v784
        %s787 = sld [smem:[#allocation2 + $0x1c]]
        %v788 = vstv %s787
        %v789 = vmul.f32 %v788, %v241
        %v790 = vmul.f32 %v788, %v242
        %v791 = vadd.f32 %v789, 0.0
        %v792 = vadd.f32 %v790, 0.0
        %s793 = sld [smem:[#allocation2 + $0x4d]]
        %v794 = vstv %s793
        %v795 = vmul.f32 %v794, %v253
        %v796 = vmul.f32 %v794, %v254
        %v797 = vadd.f32 %v791, %v795
        %v798 = vadd.f32 %v792, %v796
        %s799 = sld [smem:[#allocation2 + $0x1d]]
        %v800 = vstv %s799
        %v801 = vmul.f32 %v800, %v272
        %v802 = vmul.f32 %v800, %v273
        %v803 = vadd.f32 %v797, %v801
        %v804 = vadd.f32 %v798, %v802
        %s805 = sld [smem:[#allocation2 + $0x4e]]
        %v806 = vstv %s805
        %v807 = vmul.f32 %v806, %v282
        %v808 = vmul.f32 %v806, %v283
        %v809 = vadd.f32 %v803, %v807
        %v810 = vadd.f32 %v804, %v808
        %s811 = sld [smem:[#allocation2 + $0x1e]]
        %v812 = vstv %s811
        %v813 = vmul.f32 %v812, %v301
        %v814 = vmul.f32 %v812, %v302
        %v815 = vadd.f32 %v809, %v813
        %v816 = vadd.f32 %v810, %v814
        %s817 = sld [smem:[#allocation2 + $0x4f]]
        %v818 = vstv %s817
        %v819 = vmul.f32 %v818, %v311
        %v820 = vmul.f32 %v818, %v312
        %v821 = vadd.f32 %v815, %v819
        %v822 = vadd.f32 %v816, %v820
        %s823 = sld [smem:[#allocation2 + $0x1f]]
        %v824 = vstv %s823
        %v825 = vmul.f32 %v824, %v319
        %v826 = vmul.f32 %v824, %v320
        %v827 = vadd.f32 %v821, %v825
        %v828 = vadd.f32 %v822, %v826
        %s829 = sld [smem:[#allocation2 + $0x50]]
        %v830 = vstv %s829
        %v831 = vmul.f32 %v830, %v321
        %v832 = vmul.f32 %v830, %v322
        %v833 = vadd.f32 %v827, %v831
        %v834 = vadd.f32 %v828, %v832
        %s835 = sld [smem:[#allocation2 + $0x20]]
        %v836 = vstv %s835
        %v837 = vmul.f32 %v836, %v340
        %v838 = vmul.f32 %v836, %v341
        %v839 = vadd.f32 %v833, %v837
        %v840 = vadd.f32 %v834, %v838
        %s841 = sld [smem:[#allocation2 + $0x51]]
        %v842 = vstv %s841
        %v843 = vmul.f32 %v842, %v350
        %v844 = vmul.f32 %v842, %v351
        %v845 = vadd.f32 %v839, %v843
        %v846 = vadd.f32 %v840, %v844
        %s847 = sld [smem:[#allocation2 + $0x21]]
        %v848 = vstv %s847
        %v849 = vmul.f32 %v848, %v369
        %v850 = vmul.f32 %v848, %v370
        %v851 = vadd.f32 %v845, %v849
        %v852 = vadd.f32 %v846, %v850
        %s853 = sld [smem:[#allocation2 + $0x52]]
        %v854 = vstv %s853
        %v855 = vmul.f32 %v854, %v379
        %v856 = vmul.f32 %v854, %v380
        %v857 = vadd.f32 %v851, %v855
        %v858 = vadd.f32 %v852, %v856
        %s859 = sld [smem:[#allocation2 + $0x22]]
        %v860 = vstv %s859
        %v861 = vmul.f32 %v860, %v398
        %v862 = vmul.f32 %v860, %v399
        %v863 = vadd.f32 %v857, %v861
        %v864 = vadd.f32 %v858, %v862
        %s865 = sld [smem:[#allocation2 + $0x53]]
        %v866 = vstv %s865
        %v867 = vmul.f32 %v866, %v408
        %v868 = vmul.f32 %v866, %v409
        %v869 = vadd.f32 %v863, %v867
        %v870 = vadd.f32 %v864, %v868
        %873 = vrot.lane.b32.xlu0 %v869, 112
        %v874 = vpop.permute.xlu0 %873
        %875 = vrot.lane.b32.xlu0 %v870, 112
        %v876 = vpop.permute.xlu0 %875
        %vm877 = vcmask 916480
        %v878 = vsel %vm877, %v874, %v876
        %v881 = vsel %vm877, %v876, 0.0
        %v882 = vadd.f32 %v785, %v878
        %v883 = vadd.f32 %v786, %v881
        %s884 = sld [smem:[#allocation2 + $0x23]]
        %v885 = vstv %s884
        %v886 = vmul.f32 %v885, %v241
        %v887 = vmul.f32 %v885, %v242
        %v888 = vadd.f32 %v886, 0.0
        %v889 = vadd.f32 %v887, 0.0
        %s890 = sld [smem:[#allocation2 + $0x54]]
        %v891 = vstv %s890
        %v892 = vmul.f32 %v891, %v253
        %v893 = vmul.f32 %v891, %v254
        %v894 = vadd.f32 %v888, %v892
        %v895 = vadd.f32 %v889, %v893
        %s896 = sld [smem:[#allocation2 + $0x24]]
        %v897 = vstv %s896
        %v898 = vmul.f32 %v897, %v272
        %v899 = vmul.f32 %v897, %v273
        %v900 = vadd.f32 %v894, %v898
        %v901 = vadd.f32 %v895, %v899
        %s902 = sld [smem:[#allocation2 + $0x55]]
        %v903 = vstv %s902
        %v904 = vmul.f32 %v903, %v282
        %v905 = vmul.f32 %v903, %v283
        %v906 = vadd.f32 %v900, %v904
        %v907 = vadd.f32 %v901, %v905
        %s908 = sld [smem:[#allocation2 + $0x25]]
        %v909 = vstv %s908
        %v910 = vmul.f32 %v909, %v301
        %v911 = vmul.f32 %v909, %v302
        %v912 = vadd.f32 %v906, %v910
        %v913 = vadd.f32 %v907, %v911
        %s914 = sld [smem:[#allocation2 + $0x56]]
        %v915 = vstv %s914
        %v916 = vmul.f32 %v915, %v311
        %v917 = vmul.f32 %v915, %v312
        %v918 = vadd.f32 %v912, %v916
        %v919 = vadd.f32 %v913, %v917
        %s920 = sld [smem:[#allocation2 + $0x26]]
        %v921 = vstv %s920
        %v922 = vmul.f32 %v921, %v319
        %v923 = vmul.f32 %v921, %v320
        %v924 = vadd.f32 %v918, %v922
        %v925 = vadd.f32 %v919, %v923
        %s926 = sld [smem:[#allocation2 + $0x57]]
        %v927 = vstv %s926
        %v928 = vmul.f32 %v927, %v321
        %v929 = vmul.f32 %v927, %v322
        %v930 = vadd.f32 %v924, %v928
        %v931 = vadd.f32 %v925, %v929
        %s932 = sld [smem:[#allocation2 + $0x27]]
        %v933 = vstv %s932
        %v934 = vmul.f32 %v933, %v340
        %v935 = vmul.f32 %v933, %v341
        %v936 = vadd.f32 %v930, %v934
        %v937 = vadd.f32 %v931, %v935
        %s938 = sld [smem:[#allocation2 + $0x58]]
        %v939 = vstv %s938
        %v940 = vmul.f32 %v939, %v350
        %v941 = vmul.f32 %v939, %v351
        %v942 = vadd.f32 %v936, %v940
        %v943 = vadd.f32 %v937, %v941
        %s944 = sld [smem:[#allocation2 + $0x28]]
        %v945 = vstv %s944
        %v946 = vmul.f32 %v945, %v369
        %v947 = vmul.f32 %v945, %v370
        %v948 = vadd.f32 %v942, %v946
        %v949 = vadd.f32 %v943, %v947
        %s950 = sld [smem:[#allocation2 + $0x59]]
        %v951 = vstv %s950
        %v952 = vmul.f32 %v951, %v379
        %v953 = vmul.f32 %v951, %v380
        %v954 = vadd.f32 %v948, %v952
        %v955 = vadd.f32 %v949, %v953
        %s956 = sld [smem:[#allocation2 + $0x29]]
        %v957 = vstv %s956
        %v958 = vmul.f32 %v957, %v398
        %v959 = vmul.f32 %v957, %v399
        %v960 = vadd.f32 %v954, %v958
        %v961 = vadd.f32 %v955, %v959
        %s962 = sld [smem:[#allocation2 + $0x5a]]
        %v963 = vstv %s962
        %v964 = vmul.f32 %v963, %v408
        %v965 = vmul.f32 %v963, %v409
        %v966 = vadd.f32 %v960, %v964
        %v967 = vadd.f32 %v961, %v965
        %970 = vrot.lane.b32.xlu0 %v966, 96
        %v971 = vpop.permute.xlu0 %970
        %972 = vrot.lane.b32.xlu0 %v967, 96
        %v973 = vpop.permute.xlu0 %972
        %vm974 = vcmask 785408
        %v975 = vsel %vm974, %v971, %v973
        %v978 = vsel %vm974, %v973, 0.0
        %v979 = vadd.f32 %v882, %v975
        %v980 = vadd.f32 %v883, %v978
        %s981 = sld [smem:[#allocation2 + $0x2a]]
        %v982 = vstv %s981
        %v983 = vmul.f32 %v982, %v241
        %v984 = vmul.f32 %v982, %v242
        %v985 = vadd.f32 %v983, 0.0
        %v986 = vadd.f32 %v984, 0.0
        %s987 = sld [smem:[#allocation2 + $0x5b]]
        %v988 = vstv %s987
        %v989 = vmul.f32 %v988, %v253
        %v990 = vmul.f32 %v988, %v254
        %v991 = vadd.f32 %v985, %v989
        %v992 = vadd.f32 %v986, %v990
        %s993 = sld [smem:[#allocation2 + $0x2b]]
        %v994 = vstv %s993
        %v995 = vmul.f32 %v994, %v272
        %v996 = vmul.f32 %v994, %v273
        %v997 = vadd.f32 %v991, %v995
        %v998 = vadd.f32 %v992, %v996
        %s999 = sld [smem:[#allocation2 + $0x5c]]
        %v1000 = vstv %s999
        %v1001 = vmul.f32 %v1000, %v282
        %v1002 = vmul.f32 %v1000, %v283
        %v1003 = vadd.f32 %v997, %v1001
        %v1004 = vadd.f32 %v998, %v1002
        %s1005 = sld [smem:[#allocation2 + $0x2c]]
        %v1006 = vstv %s1005
        %v1007 = vmul.f32 %v1006, %v301
        %v1008 = vmul.f32 %v1006, %v302
        %v1009 = vadd.f32 %v1003, %v1007
        %v1010 = vadd.f32 %v1004, %v1008
        %s1011 = sld [smem:[#allocation2 + $0x5d]]
        %v1012 = vstv %s1011
        %v1013 = vmul.f32 %v1012, %v311
        %v1014 = vmul.f32 %v1012, %v312
        %v1015 = vadd.f32 %v1009, %v1013
        %v1016 = vadd.f32 %v1010, %v1014
        %s1017 = sld [smem:[#allocation2 + $0x2d]]
        %v1018 = vstv %s1017
        %v1019 = vmul.f32 %v1018, %v319
        %v1020 = vmul.f32 %v1018, %v320
        %v1021 = vadd.f32 %v1015, %v1019
        %v1022 = vadd.f32 %v1016, %v1020
        %s1023 = sld [smem:[#allocation2 + $0x5e]]
        %v1024 = vstv %s1023
        %v1025 = vmul.f32 %v1024, %v321
        %v1026 = vmul.f32 %v1024, %v322
        %v1027 = vadd.f32 %v1021, %v1025
        %v1028 = vadd.f32 %v1022, %v1026
        %s1029 = sld [smem:[#allocation2 + $0x2e]]
        %v1030 = vstv %s1029
        %v1031 = vmul.f32 %v1030, %v340
        %v1032 = vmul.f32 %v1030, %v341
        %v1033 = vadd.f32 %v1027, %v1031
        %v1034 = vadd.f32 %v1028, %v1032
        %s1035 = sld [smem:[#allocation2 + $0x5f]]
        %v1036 = vstv %s1035
        %v1037 = vmul.f32 %v1036, %v350
        %v1038 = vmul.f32 %v1036, %v351
        %v1039 = vadd.f32 %v1033, %v1037
        %v1040 = vadd.f32 %v1034, %v1038
        %s1041 = sld [smem:[#allocation2 + $0x2f]]
        %v1042 = vstv %s1041
        %v1043 = vmul.f32 %v1042, %v369
        %v1044 = vmul.f32 %v1042, %v370
        %v1045 = vadd.f32 %v1039, %v1043
        %v1046 = vadd.f32 %v1040, %v1044
        %s1047 = sld [smem:[#allocation2 + $0x60]]
        %v1048 = vstv %s1047
        %v1049 = vmul.f32 %v1048, %v379
        %v1050 = vmul.f32 %v1048, %v380
        %v1051 = vadd.f32 %v1045, %v1049
        %v1052 = vadd.f32 %v1046, %v1050
        %s1053 = sld [smem:[#allocation2 + $0x30]]
        %v1054 = vstv %s1053
        %v1055 = vmul.f32 %v1054, %v398
        %v1056 = vmul.f32 %v1054, %v399
        %v1057 = vadd.f32 %v1051, %v1055
        %v1058 = vadd.f32 %v1052, %v1056
        %s1059 = sld [smem:[#allocation2 + $0x61]]
        %v1060 = vstv %s1059
        %v1061 = vmul.f32 %v1060, %v408
        %v1062 = vmul.f32 %v1060, %v409
        %v1063 = vadd.f32 %v1057, %v1061
        %v1064 = vadd.f32 %v1058, %v1062
        %1067 = vrot.lane.b32.xlu0 %v1063, 80
        %v1068 = vpop.permute.xlu0 %1067
        %1069 = vrot.lane.b32.xlu0 %v1064, 80
        %v1070 = vpop.permute.xlu0 %1069
        %vm1071 = vcmask 654336
        %v1072 = vsel %vm1071, %v1068, %v1070
        %v1075 = vsel %vm1071, %v1070, 0.0
        %v1076 = vadd.f32 %v979, %v1072
        %v1077 = vadd.f32 %v980, %v1075
        %v1078 = vsub.f32 0.0, %v1076
        %v1079 = vsub.f32 0.0, %v1077
        %v1080 = vmul.f32 %v1078, 1.442695
        %v1081 = vpow.pop %v1080
        %v1082 = vmul.f32 %v1079, 1.442695
        %v1083 = vpow.pop %v1082
        %v1084 = vadd.f32 %v1081, 1.0
        %v1085 = vadd.f32 %v1083, 1.0
        %v1086 = vrcp.pop %v1084
        %v1087 = vmul.f32 1.0, %v1086
        %v1088 = vrcp.pop %v1085
        %v1089 = vmul.f32 1.0, %v1088
        %v1090 = vlaneseq
        %v1091 = vshrl.u32 %v1090, 7
        %v1092 = vsub.s32 0, %v1091
        %v1093 = vrot.slane %v1087, %v1092
        %v1094 = vlaneseq
        %v1095 = vshrl.u32 %v1094, 7
        %v1096 = vsub.s32 0, %v1095
        %v1097 = vrot.slane %v1089, %v1096
        %v1100 = vcombine.low %v1093, %v1097
        %v1102 = vmul.f32 %v158, %v1100
        %1103 = vst [vmem:[%s157] sm:$0xff] %v1102
        %p1104 = scmp.lt.s32.totalorder %s14, 1
        %s1105 = scalar_select %p1104, %s14, 1
        %s1106 = smul.addr %s1105, 2
        %s1107 = smul.addr %s1106, 4
        %s1108 = scalar_lea.vmem %s2, %s1107
        // Predicated region
        $region33: #{spatial_attention.1} parent=27 // pred_check
          %p1109 = pneg %p79
        $region34: #{spatial_attention.1} parent=27 // pred_check_branch
          %1111 = sbr.rel (%p1109) target = $region36
        $region35: #{spatial_attention.1} parent=27 // pred_region
          _
        $region36: #{spatial_attention.1} parent=27 // pred_fallthru
          _
      $region28: #{spatial_attention.1} parent=5 // pred_fallthru
        _
      %p1112 = scmp.le.s32.totalorder 2, %s9
      // Predicated region
      $region37: #{spatial_attention.1} parent=5 // pred_check
        %p1113 = pneg %p1112
      $region38: #{spatial_attention.1} parent=5 // pred_check_branch
        %1115 = sbr.rel (%p1113) target = $region40
      $region39: #{spatial_attention.1} parent=5 // pred_region
        %s1116 = ssub.s32 %s9, 2
        // Predicated region
        $region41: #{spatial_attention.1} parent=39 // pred_check
          %p1117 = pneg %p85
        $region42: #{spatial_attention.1} parent=39 // pred_check_branch
          %1119 = sbr.rel (%p1117) target = $region44
        $region43: #{spatial_attention.1} parent=39 // pred_region
          %p1120 = scmp.lt.s32.totalorder %s15, 1
          %s1121 = scalar_select %p1120, %s15, 1
          %s1122 = smul.addr %s1121, 2
          %s1123 = smul.addr %s1122, 4
          %s1124 = scalar_lea.vmem %s2, %s1123
        $region44: #{spatial_attention.1} parent=39 // pred_fallthru
          _
      $region40: #{spatial_attention.1} parent=5 // pred_fallthru
        _
    $region6: #{spatial_attention.1} parent=1 // loop_footer
      %s13 = sadd.s32 1, %s9
    $region7: #{spatial_attention.1} parent=1 // loop_footer_branch
      %8 = sbr.rel target = $region3
    $region8: #{spatial_attention.1} parent=1 // loop_exit
      _
    %1125 = vsyncpa [#allocation3], 1
    %s1126 = scalar_lea.sflag [#allocation3], 1
    %1127 = vsyncpa %s1126, 1

</llo_original>
